<compile_context>
chip_gen: v7x
topology: tpu7x:2x2x1
jax: 0.10.0
libtpu: 0.0.40
codegen_flags: <defaults>
</compile_context>

<pallas_src>
import functools

import jax
import jax.numpy as jnp
import numpy as np
from jax.experimental import pallas as pl
from jax.experimental.pallas import tpu as pltpu


def _round_up(a, b):
    return ((a + b - 1) // b) * b


def _choose_pack(c, D, H):
    """Positions packed per kernel row: make the output lane width R*c == 128
    when possible, but keep packed lane widths bounded for VMEM/vreg pressure."""
    if 128 % c != 0:
        return 1
    R = 128 // c
    while R > 1 and R * max(D, H) > 2048:
        R //= 2
    return R


def _mxu_tile():
    """MXU K/N tile per generation: 128 up to v5, 256 on v6e / v7x / newer."""
    try:
        kind = jax.devices()[0].device_kind.lower()
    except Exception:
        return 256
    if any(tag in kind for tag in ("v2", "v3", "v4", "v5")):
        return 128
    return 256


def _choose_split(R, D, H):
    """Number of on-diagonal sub-matmuls for the block-diagonal MLP weights.

    The packed Linear weights are block-diagonal (R identical DxH / HxD
    blocks); splitting the dots into S diagonal chunks whose K width matches
    the MXU tile removes the all-zero off-diagonal MXU passes (50% of passes
    on v6e/v7x, 75% on v5e for R=16, D=32, H=64).  Correctness never depends
    on S."""
    S = max(1, (R * D) // _mxu_tile())
    while S > 1 and not (R % S == 0
                         and ((R // S) * D) % 128 == 0
                         and ((R // S) * H) % 128 == 0):
        S -= 1
    return S


def _probe_roll_direction():
    """One-time on-device probe of pltpu.roll's rotation direction so the
    in-kernel within-block roll tree is correct on any backend/version.
    Returns True (numpy semantics out[i] = x[i - shift]), False (reversed),
    or None (unknown -> fall back to the matmul-based group sum)."""
    try:
        def _k(x_ref, o_ref):
            o_ref[...] = pltpu.roll(x_ref[...], shift=1, axis=-1)

        x = np.arange(8 * 128, dtype=np.float32).reshape(8, 128)
        y = pl.pallas_call(
            _k, out_shape=jax.ShapeDtypeStruct((8, 128), jnp.float32))(
                jnp.asarray(x))
        y = np.asarray(jax.device_get(y))
        if np.array_equal(y, np.roll(x, 1, axis=-1)):
            return True
        if np.array_equal(y, np.roll(x, -1, axis=-1)):
            return False
    except Exception:
        pass
    return None


def _roll_back_within_blocks(v, shift, block, roll_numpy):
    """out[..., f] = v[..., blk(f) + ((f%block - shift) mod block)]: cyclic roll
    by `shift` within each contiguous `block`-lane group along the last axis.
    Two full-width XLU rolls + one VPU select; no MXU work."""
    n = v.shape[-1]
    if n == block:
        amt = shift if roll_numpy else (n - shift) % n
        return pltpu.roll(v, shift=amt, axis=-1)
    if roll_numpy:
        main, wrap = shift, (n - block + shift) % n
    else:
        main, wrap = (n - shift) % n, (block - shift) % n
    lane_in_blk = jax.lax.broadcasted_iota(jnp.int32, v.shape, v.ndim - 1) % block
    return jnp.where(lane_in_blk >= shift,
                     pltpu.roll(v, shift=main, axis=-1),
                     pltpu.roll(v, shift=wrap, axis=-1))


def attention_pool_kernel(x_ref, w1_ref, w2_ref, g_ref, o_ref, *,
                          n_split, m, c, roll_numpy):
    # x_ref : (tile, R*D)   bf16 -- R packed positions per row, native lane order
    # w1_ref: (Rs*D, Rs*H)  bf16 -- ONE on-diagonal chunk of block-diag Linear 1
    # w2_ref: (Rs*H, Rs*D)  bf16 -- ONE on-diagonal chunk of block-diag Linear 2
    # g_ref : (R*D, R*c)    bf16 -- block-diagonal group indicator (lane -> channel)
    # o_ref : (tile, R*c)   f32  -- lane-dense packed output
    D = m * c
    xb = x_ref[...]
    xf = xb.astype(jnp.float32)
    kx = xb.shape[-1] // n_split            # = Rs*D, a multiple of 128

    # attention_weights MLP (Linear -> ReLU -> Linear -> Sigmoid), computed as
    # n_split on-diagonal sub-matmuls so no MXU pass lands on an all-zero
    # off-diagonal chunk of the block-diagonalized weights.  bf16 MXU operands,
    # f32 accumulation.
    e_parts = []
    for s in range(n_split):
        xs = xb[:, s * kx:(s + 1) * kx]                       # 128-aligned slice
        hs = jnp.maximum(
            jnp.dot(xs, w1_ref[...], preferred_element_type=jnp.float32), 0.0)
        ys = jax.nn.sigmoid(
            jnp.dot(hs.astype(jnp.bfloat16), w2_ref[...],
                    preferred_element_type=jnp.float32))
        # y = sigmoid(.) is in (0, 1): exp without max-subtraction cannot
        # overflow.  Do NOT drop this invariant if the MLP head ever changes.
        e_parts.append(jnp.exp(ys))
    e = e_parts[0] if n_split == 1 else jnp.concatenate(e_parts, axis=-1)

    # Grouped softmax over the m lanes of each (position, channel) group and
    # the weighted sum over m (channel of lane f is f % c within each D block).
    if roll_numpy is not None and (m & (m - 1)) == 0:
        # Denominator via a within-block roll+add tree (XLU/VPU, which have
        # slack under this MXU-bound kernel); exact f32 sum.  Only ONE
        # group-sum matmul (the numerator) remains.
        den = e
        shift = c
        while shift < D:
            den = den + _roll_back_within_blocks(den, shift, D, roll_numpy)
            shift *= 2
        w = (xf * e) * pl.reciprocal(den, approx=True)        # (tile, R*D)
        out = jnp.dot(w.astype(jnp.bfloat16), g_ref[...],
                      preferred_element_type=jnp.float32)     # (tile, R*c)
    else:
        # Fallback (m not a power of two, or roll direction unknown):
        # numerator and denominator via two group-sum matmuls.
        num = jnp.dot((xf * e).astype(jnp.bfloat16), g_ref[...],
                      preferred_element_type=jnp.float32)
        den = jnp.dot(e.astype(jnp.bfloat16), g_ref[...],
                      preferred_element_type=jnp.float32)
        out = num * pl.reciprocal(den, approx=True)

    o_ref[...] = out.astype(o_ref.dtype)


def prepare_attention_pool_params(w1, w2, m, c):
    """One-time weight prep.

    * Permutes W1 rows / W2 columns from torch lane order d = ci*m + mi to the
      native lane order f = mi*c + ci, so x never needs a host transpose.
    * Block-diagonalizes for R-way row packing (lane-dense 128-wide output),
      but ships only ONE on-diagonal chunk of W1/W2 (all S diagonal chunks are
      identical) so the kernel's split matmuls never touch an all-zero MXU
      chunk and the resident weight footprint shrinks by S.
    * Casts constants to bf16 (MXU-native operands, f32 accumulation).
    """
    D, H = w1.shape
    assert D == m * c
    R = _choose_pack(c, D, H)
    S = _choose_split(R, D, H)
    Rs = R // S

    # native index f = mi*c + ci  <->  torch index d = ci*m + mi
    w1n = w1.reshape(c, m, H).transpose(1, 0, 2).reshape(D, H)   # rows permuted
    w2n = w2.reshape(H, c, m).transpose(0, 2, 1).reshape(H, D)   # cols permuted
    # group indicator in native order: lane f belongs to channel f % c
    g = (jnp.arange(D)[:, None] % c == jnp.arange(c)[None, :]).astype(jnp.float32)

    def bdiag(a, k):
        eye = jnp.eye(k, dtype=a.dtype)
        return jnp.einsum('pq,ij->piqj', eye, a).reshape(k * a.shape[0],
                                                         k * a.shape[1])

    mxu = jnp.bfloat16
    return dict(
        w1=bdiag(w1n, Rs).astype(mxu),       # (Rs*D, Rs*H) shared diagonal chunk
        w2=bdiag(w2n, Rs).astype(mxu),       # (Rs*H, Rs*D) shared diagonal chunk
        g=bdiag(g, R).astype(mxu),           # (R*D, R*c)
        R=R, S=S, m=m, c=c, H=H,
        roll_numpy=_probe_roll_direction(),
    )


def _select_tile_rows(rows, tile_rows, align=16):
    """Row tile: as large as possible, but an EVEN number of grid steps when
    there is enough work so v7x can shard them across its two TensorCores.
    align=16 keeps bf16 sublane tiling happy."""
    if rows <= align:
        return align
    if rows <= 2 * tile_rows:
        return _round_up(pl.cdiv(rows, 2), align)
    steps = 2 * pl.cdiv(rows, 2 * tile_rows)          # even step count
    return _round_up(pl.cdiv(rows, steps), align)


def attention_pool(x, params, tile_rows=512):
    """x: (b, t, m, c) float. params: from prepare_attention_pool_params."""
    b, t, m, c = x.shape
    R, S, H = params['R'], params['S'], params['H']
    assert params['m'] == m and params['c'] == c
    D = m * c
    Rs = R // S
    N = b * t

    # Native lane order: pure reshape, NO host transpose of x.  bf16 input
    # halves x's HBM traffic (every MXU operand is bf16 anyway).  A host pad is
    # only needed when N is not a multiple of R (<= R-1 positions); callers can
    # supply b*t % R == 0 to make the wrapper copy-free.
    n_r = _round_up(N, R)
    rows = n_r // R
    x_flat = x.reshape(N, D).astype(jnp.bfloat16)
    if n_r != N:
        x_flat = jnp.pad(x_flat, ((0, n_r - N), (0, 0)))
    x_packed = x_flat.reshape(rows, R * D)           # pure reshape (R pos / row)

    tr = _select_tile_rows(rows, tile_rows)
    rows_k = max(rows, tr)                           # only pads tiny inputs
    if rows_k != rows:
        x_packed = jnp.pad(x_packed, ((0, rows_k - rows), (0, 0)))
    grid = (pl.cdiv(rows_k, tr),)                    # ragged last tile: Pallas masks

    kernel = functools.partial(
        attention_pool_kernel, n_split=S, m=m, c=c,
        roll_numpy=params['roll_numpy'])

    out = pl.pallas_call(
        kernel,
        out_shape=jax.ShapeDtypeStruct((rows_k, R * c), jnp.float32),
        grid_spec=pltpu.PrefetchScalarGridSpec(
            num_scalar_prefetch=0,
            grid=grid,
            in_specs=[
                pl.BlockSpec((tr, R * D), lambda i: (i, 0)),        # x (row-tiled)
                pl.BlockSpec((Rs * D, Rs * H), lambda i: (0, 0)),   # W1 chunk (resident)
                pl.BlockSpec((Rs * H, Rs * D), lambda i: (0, 0)),   # W2 chunk (resident)
                pl.BlockSpec((R * D, R * c), lambda i: (0, 0)),     # G (resident)
            ],
            out_specs=pl.BlockSpec((tr, R * c), lambda i: (i, 0)),
        ),
        compiler_params=pltpu.CompilerParams(
            dimension_semantics=("parallel",),
            vmem_limit_bytes=24 * 1024 * 1024),
    )(x_packed, params['w1'], params['w2'], params['g'])

    # Unpack: pure reshape (+ crop of padded / out-of-bounds rows).
    return out.reshape(rows_k * R, c)[:N].reshape(b, t, c)


def attention_pool_ref(x, w1, w2):
    """Pure-JAX f32 reference mirroring the PyTorch forward exactly."""
    b, t, m, c = x.shape
    xf = jnp.transpose(x, (0, 1, 3, 2)).reshape(b, t, m * c)
    y = jax.nn.sigmoid(jnp.maximum(xf @ w1, 0.0) @ w2)
    xv = xf.reshape(b, t, c, m)
    yv = y.reshape(b, t, c, m)
    ys = jax.nn.softmax(yv, axis=-1)
    return jnp.sum(xv * ys, axis=-1)


if __name__ == "__main__":
    # Small shapes consistent with the module: x (b, t, m, c), input_dim = m*c,
    # reduction = 2.  t=300 exercises the multiple-of-R pad and a ragged 2-step grid.
    b, t, m, c = 2, 300, 4, 8
    D = m * c            # input_dim = 32
    reduction = 2
    H = D * reduction    # 64

    key = jax.random.PRNGKey(0)
    kx, k1, k2 = jax.random.split(key, 3)
    x = jax.random.normal(kx, (b, t, m, c), dtype=jnp.float32)
    # Deterministic synthetic weights (Linear bias=False), stored as (in, out)
    # so y = x @ W (equivalent to torch's x @ weight.T).
    w1 = jax.random.normal(k1, (D, H), dtype=jnp.float32) * (1.0 / jnp.sqrt(D))
    w2 = jax.random.normal(k2, (H, D), dtype=jnp.float32) * (1.0 / jnp.sqrt(H))

    params = prepare_attention_pool_params(w1, w2, m, c)

    out = attention_pool(x, params)
    out = jax.block_until_ready(out)

    ref = attention_pool_ref(x, w1, w2)
    assert out.shape == (b, t, c), out.shape
    max_err = float(jnp.max(jnp.abs(out - ref)))
    # bf16 MXU operands + bf16 x input vs. the f32 reference -> loose tol.
    assert jnp.allclose(out, ref, atol=5e-2, rtol=5e-2), max_err

    print("KERNEL_OK")
</pallas_src>

<mosaic_0001>
module attributes {stable_mosaic.version = 11 : i64} {
  func.func @attention_pool_kernel(%arg0: i32, %arg1: memref<32x512xbf16, #tpu.memory_space<vmem>>, %arg2: memref<256x512xbf16, #tpu.memory_space<vmem>>, %arg3: memref<512x256xbf16, #tpu.memory_space<vmem>>, %arg4: memref<512x128xbf16, #tpu.memory_space<vmem>>, %arg5: memref<32x128xf32, #tpu.memory_space<vmem>>) attributes {dimension_semantics = [#tpu.dimension_semantics<parallel>], iteration_bounds = array<i64: 2>, scalar_prefetch = 0 : i64, scratch_operands = 0 : i64, tpu.core_type = #tpu.core_type<tc>, window_params = [{transform_indices = @transform_0, window_bounds = array<i64: 32, 512>}, {pipeline_mode = #tpu.pipeline_mode<synchronous>, transform_indices = @transform_1, window_bounds = array<i64: 256, 512>}, {pipeline_mode = #tpu.pipeline_mode<synchronous>, transform_indices = @transform_2, window_bounds = array<i64: 512, 256>}, {pipeline_mode = #tpu.pipeline_mode<synchronous>, transform_indices = @transform_3, window_bounds = array<i64: 512, 128>}, {transform_indices = @transform_4, window_bounds = array<i64: 32, 128>}]} {
    %c0 = arith.constant 0 : index
    %c0_0 = arith.constant 0 : index
    %0 = vector.load %arg1[%c0, %c0_0] : memref<32x512xbf16, #tpu.memory_space<vmem>>, vector<32x512xbf16>
    %1 = arith.extf %0 : vector<32x512xbf16> to vector<32x512xf32>
    %2 = vector.extract_strided_slice %0 {offsets = [0, 0], sizes = [32, 256], strides = [1, 1]} : vector<32x512xbf16> to vector<32x256xbf16>
    %c0_1 = arith.constant 0 : index
    %c0_2 = arith.constant 0 : index
    %3 = vector.load %arg2[%c0_1, %c0_2] : memref<256x512xbf16, #tpu.memory_space<vmem>>, vector<256x512xbf16>
    %cst = arith.constant dense<0.000000e+00> : vector<32x512xf32>
    %4 = tpu.matmul %2, %3, %cst {dimension_numbers = #tpu.dot_dimension_numbers<[1], [0], [0], [1], [0, 0, 1, 1], [], []>} : vector<32x256xbf16>, vector<256x512xbf16>, vector<32x512xf32> -> vector<32x512xf32>
    %cst_3 = arith.constant 0.000000e+00 : f32
    %5 = vector.broadcast %cst_3 : f32 to vector<32x512xf32>
    %6 = arith.maximumf %4, %5 : vector<32x512xf32>
    %7 = arith.truncf %6 : vector<32x512xf32> to vector<32x512xbf16>
    %c0_4 = arith.constant 0 : index
    %c0_5 = arith.constant 0 : index
    %8 = vector.load %arg3[%c0_4, %c0_5] : memref<512x256xbf16, #tpu.memory_space<vmem>>, vector<512x256xbf16>
    %cst_6 = arith.constant dense<0.000000e+00> : vector<32x256xf32>
    %9 = tpu.matmul %7, %8, %cst_6 {dimension_numbers = #tpu.dot_dimension_numbers<[1], [0], [0], [1], [0, 0, 1, 1], [], []>} : vector<32x512xbf16>, vector<512x256xbf16>, vector<32x256xf32> -> vector<32x256xf32>
    %10 = arith.negf %9 : vector<32x256xf32>
    %11 = math.exp %10 : vector<32x256xf32>
    %cst_7 = arith.constant 1.000000e+00 : f32
    %12 = vector.broadcast %cst_7 : f32 to vector<32x256xf32>
    %13 = arith.addf %12, %11 : vector<32x256xf32>
    %14 = arith.divf %12, %13 : vector<32x256xf32>
    %15 = math.exp %14 : vector<32x256xf32>
    %16 = vector.extract_strided_slice %0 {offsets = [0, 256], sizes = [32, 256], strides = [1, 1]} : vector<32x512xbf16> to vector<32x256xbf16>
    %c0_8 = arith.constant 0 : index
    %c0_9 = arith.constant 0 : index
    %17 = vector.load %arg2[%c0_8, %c0_9] : memref<256x512xbf16, #tpu.memory_space<vmem>>, vector<256x512xbf16>
    %cst_10 = arith.constant dense<0.000000e+00> : vector<32x512xf32>
    %18 = tpu.matmul %16, %17, %cst_10 {dimension_numbers = #tpu.dot_dimension_numbers<[1], [0], [0], [1], [0, 0, 1, 1], [], []>} : vector<32x256xbf16>, vector<256x512xbf16>, vector<32x512xf32> -> vector<32x512xf32>
    %cst_11 = arith.constant 0.000000e+00 : f32
    %19 = vector.broadcast %cst_11 : f32 to vector<32x512xf32>
    %20 = arith.maximumf %18, %19 : vector<32x512xf32>
    %21 = arith.truncf %20 : vector<32x512xf32> to vector<32x512xbf16>
    %c0_12 = arith.constant 0 : index
    %c0_13 = arith.constant 0 : index
    %22 = vector.load %arg3[%c0_12, %c0_13] : memref<512x256xbf16, #tpu.memory_space<vmem>>, vector<512x256xbf16>
    %cst_14 = arith.constant dense<0.000000e+00> : vector<32x256xf32>
    %23 = tpu.matmul %21, %22, %cst_14 {dimension_numbers = #tpu.dot_dimension_numbers<[1], [0], [0], [1], [0, 0, 1, 1], [], []>} : vector<32x512xbf16>, vector<512x256xbf16>, vector<32x256xf32> -> vector<32x256xf32>
    %24 = arith.negf %23 : vector<32x256xf32>
    %25 = math.exp %24 : vector<32x256xf32>
    %cst_15 = arith.constant 1.000000e+00 : f32
    %26 = vector.broadcast %cst_15 : f32 to vector<32x256xf32>
    %27 = arith.addf %26, %25 : vector<32x256xf32>
    %28 = arith.divf %26, %27 : vector<32x256xf32>
    %29 = math.exp %28 : vector<32x256xf32>
    %30 = tpu.concatenate %15, %29 in 1 : vector<32x256xf32>, vector<32x256xf32> -> vector<32x512xf32>
    %31 = arith.mulf %1, %30 : vector<32x512xf32>
    %32 = arith.truncf %31 : vector<32x512xf32> to vector<32x512xbf16>
    %c0_16 = arith.constant 0 : index
    %c0_17 = arith.constant 0 : index
    %33 = vector.load %arg4[%c0_16, %c0_17] : memref<512x128xbf16, #tpu.memory_space<vmem>>, vector<512x128xbf16>
    %cst_18 = arith.constant dense<0.000000e+00> : vector<32x128xf32>
    %34 = tpu.matmul %32, %33, %cst_18 {dimension_numbers = #tpu.dot_dimension_numbers<[1], [0], [0], [1], [0, 0, 1, 1], [], []>} : vector<32x512xbf16>, vector<512x128xbf16>, vector<32x128xf32> -> vector<32x128xf32>
    %35 = arith.truncf %30 : vector<32x512xf32> to vector<32x512xbf16>
    %c0_19 = arith.constant 0 : index
    %c0_20 = arith.constant 0 : index
    %36 = vector.load %arg4[%c0_19, %c0_20] : memref<512x128xbf16, #tpu.memory_space<vmem>>, vector<512x128xbf16>
    %cst_21 = arith.constant dense<0.000000e+00> : vector<32x128xf32>
    %37 = tpu.matmul %35, %36, %cst_21 {dimension_numbers = #tpu.dot_dimension_numbers<[1], [0], [0], [1], [0, 0, 1, 1], [], []>} : vector<32x512xbf16>, vector<512x128xbf16>, vector<32x128xf32> -> vector<32x128xf32>
    %38 = tpu.reciprocal %37 {approx = true} : vector<32x128xf32> -> vector<32x128xf32>
    %39 = arith.mulf %34, %38 : vector<32x128xf32>
    %c0_22 = arith.constant 0 : index
    %c0_23 = arith.constant 0 : index
    %40 = vector.load %arg5[%c0_22, %c0_23] : memref<32x128xf32, #tpu.memory_space<vmem>>, vector<32x128xf32>
    tpu.vector_store %arg5[%c0_22, %c0_23], %39 {strides = array<i32>} : memref<32x128xf32, #tpu.memory_space<vmem>>, vector<32x128xf32>,
    return
  }
  func.func @transform_0(%arg0: i32) -> (i32, i32) {
    %c0_i32 = arith.constant 0 : i32
    %c0_i32_0 = arith.constant 0 : i32
    return %arg0, %c0_i32 : i32, i32
  }
  func.func @transform_1(%arg0: i32) -> (i32, i32) {
    %c0_i32 = arith.constant 0 : i32
    %c0_i32_0 = arith.constant 0 : i32
    %c0_i32_1 = arith.constant 0 : i32
    return %c0_i32, %c0_i32_0 : i32, i32
  }
  func.func @transform_2(%arg0: i32) -> (i32, i32) {
    %c0_i32 = arith.constant 0 : i32
    %c0_i32_0 = arith.constant 0 : i32
    %c0_i32_1 = arith.constant 0 : i32
    return %c0_i32, %c0_i32_0 : i32, i32
  }
  func.func @transform_3(%arg0: i32) -> (i32, i32) {
    %c0_i32 = arith.constant 0 : i32
    %c0_i32_0 = arith.constant 0 : i32
    %c0_i32_1 = arith.constant 0 : i32
    return %c0_i32, %c0_i32_0 : i32, i32
  }
  func.func @transform_4(%arg0: i32) -> (i32, i32) {
    %c0_i32 = arith.constant 0 : i32
    %c0_i32_0 = arith.constant 0 : i32
    return %arg0, %c0_i32 : i32, i32
  }
}

</mosaic_0001>

<llo_original>
// kernel: tpu_custom_call.1
$region0: #{tpu_custom_call.1}
  #allocation0 [shape = 'u32[]', space=smem, size = 0x4, offset = 0x4, fixed_abs, tag = 'smem constant byte address 0x4 - core index']
  #allocation1 [shape = 'u32[144,128]{1,0:T(1,128)}', space=vmem, size = 0x12000, scoped, tag = 'internal scratch']
  %s0 = inlined_call_operand.hbm [shape: bf16[38,512], index: 0, kind: input, shape index: {}]
  %s1 = inlined_call_operand.hbm [shape: bf16[256,512], index: 1, kind: input, shape index: {}]
  %s2 = inlined_call_operand.hbm [shape: bf16[512,256], index: 2, kind: input, shape index: {}]
  %s3 = inlined_call_operand.hbm [shape: bf16[512,128], index: 3, kind: input, shape index: {}]
  %s4 = inlined_call_operand.hbm [shape: f32[38,128], index: 4, kind: output, shape index: {}]
  %s5 = sld [smem:[#allocation0]]
  $region65: #{tpu_custom_call.1} parent=0
    _
  %s7 = ssub.s32 1, %s5
  %s8 = scalar_select 0, %s7, %s5
  $region1: #{tpu_custom_call.1} parent=0
    #allocation2 [shape = 'u8[65536]{0}', space=vmem, size = 0x10000, scoped, tag = 'input window, operand 0']
    #allocation3 [shape = 's32[2]{0}', space=sflag, size = 0x8, scoped, tag = 'scoped memory for tpu_custom_call.1']
    #allocation4 [shape = 's32[2]{0}', space=sflag, size = 0x8, scoped, tag = 'scoped memory for tpu_custom_call.1']
    #allocation5 [shape = 'u8[262144]{0}', space=vmem, size = 0x40000, scoped, tag = 'input window, operand 1, single buffered']
    #allocation6 [shape = 's32[1]{0}', space=sflag, size = 0x4, scoped, tag = 'scoped memory for tpu_custom_call.1']
    #allocation7 [shape = 'u8[262144]{0}', space=vmem, size = 0x40000, scoped, tag = 'input window, operand 2, single buffered']
    #allocation8 [shape = 'u8[131072]{0}', space=vmem, size = 0x20000, scoped, tag = 'input window, operand 3, single buffered']
    #allocation9 [shape = 's32[1]{0}', space=sflag, size = 0x4, scoped, tag = 'scoped memory for tpu_custom_call.1']
    #allocation10 [shape = 'u8[32768]{0}', space=vmem, size = 0x8000, scoped, tag = 'output window, operand 0']
    %9 = vsyncpa [#allocation3], 0
    %s10 = scalar_lea.sflag [#allocation3], 1
    %11 = vsyncpa %s10, 0
    %12 = vsyncpa [#allocation6], 0
    %13 = vsyncpa [#allocation9], 0
    %14 = vsyncpa [#allocation4], 0
    %s15 = scalar_lea.sflag [#allocation4], 1
    %16 = vsyncpa %s15, 0
    loop: start=0, step=1, limit=4
    $region2: #{tpu_custom_call.1} parent=1 // loop_pre_header
      _
    $region3: #{tpu_custom_call.1} parent=1 // loop_header
      %s18 = sphi 0, %s22
      %p19 = scmp.ge.s32.totalorder %s18, 4
      %s28 = sphi 0, %s30
      %s31 = sphi 0, %s28
      %s32 = sphi 0, %s31
      %s48 = sphi 0, %s32
      %s52 = sphi 0, %s52
      %s54 = sphi 0, %s52
      %s55 = sphi 0, %s54
      %s69 = sphi 0, %s55
      %s73 = sphi 0, %s73
      %s75 = sphi 0, %s73
      %s76 = sphi 0, %s75
      %s90 = sphi 0, %s76
      %s94 = sphi 0, %s94
      %s96 = sphi 0, %s94
      %s97 = sphi 0, %s96
      %s111 = sphi 0, %s97
      %s117 = sphi 0, %s119
      %s120 = sphi 0, %s117
      %s121 = sphi 0, %s120
      %s137 = sphi 0, %s121
    $region4: #{tpu_custom_call.1} parent=1 // loop_header_branch
      %21 = sbr.rel (%p19) target = $region8
    $region5: #{tpu_custom_call.1} parent=1 // loop_body
      %s23 = ssub.s32 %s18, 1
      %s24 = ssub.s32 %s18, 2
      %s25 = sadd.s32 %s18, 1
      %s26 = ssub.s32 %s18, %s25
      %p27 = scmp.eq.s32.totalorder %s26, 0
      %s29 = sadd.s32 %s28, 1
      %s30 = scalar_select %p27, %s28, %s29
      %p33 = pneg %p27
      %p34 = scmp.eq.s32.totalorder %s18, 1
      %p35 = por %p33, %p34
      %p36 = scmp.ne.s32.totalorder %s28, %s31
      %p37 = scmp.eq.s32.totalorder %s18, 0
      %p38 = por %p36, %p37
      %p39 = scmp.ne.s32.totalorder %s28, %s31
      %p40 = scmp.eq.s32.totalorder %s23, 1
      %p41 = por %p39, %p40
      %p42 = scmp.ne.s32.totalorder %s31, %s32
      %p43 = scmp.eq.s32.totalorder %s23, 0
      %p44 = por %p42, %p43
      %p45 = scmp.ne.s32.totalorder %s31, %s32
      %p46 = scmp.eq.s32.totalorder %s24, 1
      %p47 = por %p45, %p46
      %p49 = scmp.ne.s32.totalorder %s32, %s48
      %p50 = scmp.eq.s32.totalorder %s24, 0
      %p51 = por %p49, %p50
      %s53 = sadd.s32 %s52, 1
      %p56 = scmp.eq.s32.totalorder %s18, 1
      %p57 = scmp.ne.s32.totalorder %s52, %s54
      %p58 = scmp.eq.s32.totalorder %s18, 0
      %p59 = por %p57, %p58
      %p60 = scmp.ne.s32.totalorder %s52, %s54
      %p61 = scmp.eq.s32.totalorder %s23, 1
      %p62 = por %p60, %p61
      %p63 = scmp.ne.s32.totalorder %s54, %s55
      %p64 = scmp.eq.s32.totalorder %s23, 0
      %p65 = por %p63, %p64
      %p66 = scmp.ne.s32.totalorder %s54, %s55
      %p67 = scmp.eq.s32.totalorder %s24, 1
      %p68 = por %p66, %p67
      %p70 = scmp.ne.s32.totalorder %s55, %s69
      %p71 = scmp.eq.s32.totalorder %s24, 0
      %p72 = por %p70, %p71
      %s74 = sadd.s32 %s73, 1
      %p77 = scmp.eq.s32.totalorder %s18, 1
      %p78 = scmp.ne.s32.totalorder %s73, %s75
      %p79 = scmp.eq.s32.totalorder %s18, 0
      %p80 = por %p78, %p79
      %p81 = scmp.ne.s32.totalorder %s73, %s75
      %p82 = scmp.eq.s32.totalorder %s23, 1
      %p83 = por %p81, %p82
      %p84 = scmp.ne.s32.totalorder %s75, %s76
      %p85 = scmp.eq.s32.totalorder %s23, 0
      %p86 = por %p84, %p85
      %p87 = scmp.ne.s32.totalorder %s75, %s76
      %p88 = scmp.eq.s32.totalorder %s24, 1
      %p89 = por %p87, %p88
      %p91 = scmp.ne.s32.totalorder %s76, %s90
      %p92 = scmp.eq.s32.totalorder %s24, 0
      %p93 = por %p91, %p92
      %s95 = sadd.s32 %s94, 1
      %p98 = scmp.eq.s32.totalorder %s18, 1
      %p99 = scmp.ne.s32.totalorder %s94, %s96
      %p100 = scmp.eq.s32.totalorder %s18, 0
      %p101 = por %p99, %p100
      %p102 = scmp.ne.s32.totalorder %s94, %s96
      %p103 = scmp.eq.s32.totalorder %s23, 1
      %p104 = por %p102, %p103
      %p105 = scmp.ne.s32.totalorder %s96, %s97
      %p106 = scmp.eq.s32.totalorder %s23, 0
      %p107 = por %p105, %p106
      %p108 = scmp.ne.s32.totalorder %s96, %s97
      %p109 = scmp.eq.s32.totalorder %s24, 1
      %p110 = por %p108, %p109
      %p112 = scmp.ne.s32.totalorder %s97, %s111
      %p113 = scmp.eq.s32.totalorder %s24, 0
      %p114 = por %p112, %p113
      %s115 = ssub.s32 %s18, %s25
      %p116 = scmp.eq.s32.totalorder %s115, 0
      %s118 = sadd.s32 %s117, 1
      %s119 = scalar_select %p116, %s117, %s118
      %p122 = pneg %p116
      %p123 = scmp.eq.s32.totalorder %s18, 1
      %p124 = por %p122, %p123
      %p125 = scmp.ne.s32.totalorder %s117, %s120
      %p126 = scmp.eq.s32.totalorder %s18, 0
      %p127 = por %p125, %p126
      %p128 = scmp.ne.s32.totalorder %s117, %s120
      %p129 = scmp.eq.s32.totalorder %s23, 1
      %p130 = por %p128, %p129
      %p131 = scmp.ne.s32.totalorder %s120, %s121
      %p132 = scmp.eq.s32.totalorder %s23, 0
      %p133 = por %p131, %p132
      %p134 = scmp.ne.s32.totalorder %s120, %s121
      %p135 = scmp.eq.s32.totalorder %s24, 1
      %p136 = por %p134, %p135
      %p138 = scmp.ne.s32.totalorder %s121, %s137
      %p139 = scmp.eq.s32.totalorder %s24, 0
      %p140 = por %p138, %p139
      %p141 = scmp.le.s32.totalorder 1, %s18
      %p142 = scmp.lt.s32.totalorder %s18, 3
      %p143 = pnand %p141, %p142
      %p144 = pneg %p143
      // Predicated region
      $region9: #{tpu_custom_call.1} parent=5 // pred_check
        _
      $region10: #{tpu_custom_call.1} parent=5 // pred_check_branch
        %146 = sbr.rel (%p143) target = $region12
      $region11: #{tpu_custom_call.1} parent=5 // pred_region
        %s147 = ssub.s32 %s18, 1
        // Predicated region
        $region13: #{tpu_custom_call.1} parent=11 // pred_check
          %p148 = pneg %p65
        $region14: #{tpu_custom_call.1} parent=11 // pred_check_branch
          %150 = sbr.rel (%p148) target = $region16
        $region15: #{tpu_custom_call.1} parent=11 // pred_region
          %s152 = ssub.s32 8192, 8192
          %153 = vsyncadd [#allocation6], %s152
          %s154 = sshll.u32 [#allocation5], 4
          %s155 = int_to_ptr.vmem [resolvable:$true] %s154
          %160 = dma.hbm_to_vmem [thread:$0]  %s1, 8192, %s155, [#allocation6], 256, 256, 16
        $region16: #{tpu_custom_call.1} parent=11 // pred_fallthru
          _
        // Predicated region
        $region17: #{tpu_custom_call.1} parent=11 // pred_check
          %p161 = pneg %p86
        $region18: #{tpu_custom_call.1} parent=11 // pred_check_branch
          %163 = sbr.rel (%p161) target = $region20
        $region19: #{tpu_custom_call.1} parent=11 // pred_region
          %s165 = ssub.s32 8192, 8192
          %166 = vsyncadd [#allocation6], %s165
          %s167 = sshll.u32 [#allocation7], 4
          %s168 = int_to_ptr.vmem [resolvable:$true] %s167
          %173 = dma.hbm_to_vmem [thread:$0]  %s2, 8192, %s168, [#allocation6], 128, 128, 8
        $region20: #{tpu_custom_call.1} parent=11 // pred_fallthru
          _
        // Predicated region
        $region21: #{tpu_custom_call.1} parent=11 // pred_check
          %p174 = pneg %p107
        $region22: #{tpu_custom_call.1} parent=11 // pred_check_branch
          %176 = sbr.rel (%p174) target = $region24
        $region23: #{tpu_custom_call.1} parent=11 // pred_region
          %s178 = ssub.s32 4096, 4096
          %179 = vsyncadd [#allocation9], %s178
          %s180 = sshll.u32 [#allocation8], 4
          %s181 = int_to_ptr.vmem [resolvable:$true] %s180
          %186 = dma.hbm_to_vmem [thread:$0]  %s3, 4096, %s181, [#allocation9], 64, 64, 4
        $region24: #{tpu_custom_call.1} parent=11 // pred_fallthru
          _
      $region12: #{tpu_custom_call.1} parent=5 // pred_fallthru
        _
      %p187 = scmp.lt.s32.totalorder %s18, 2
      // Predicated region
      $region25: #{tpu_custom_call.1} parent=5 // pred_check
        %p188 = pneg %p187
      $region26: #{tpu_custom_call.1} parent=5 // pred_check_branch
        %190 = sbr.rel (%p188) target = $region28
      $region27: #{tpu_custom_call.1} parent=5 // pred_region
        // Predicated region
        $region29: #{tpu_custom_call.1} parent=27 // pred_check
          %p191 = pneg %p38
        $region30: #{tpu_custom_call.1} parent=27 // pred_check_branch
          %193 = sbr.rel (%p191) target = $region32
        $region31: #{tpu_custom_call.1} parent=27 // pred_region
          %s194 = sand.u32 %s28, 1
          %s195 = scalar_lea.sflag [#allocation3], %s194
          %s196 = sand.u32 %s28, 1
          %s197 = smul.addr %s196, 64
          %s198 = scalar_lea.vmem [#allocation2], %s197
          %s199 = smul.u32 4, %s18
          %s200 = ssub.s32 5, %s199
          %p201 = scmp.lt.s32.totalorder %s200, 4
          %s202 = scalar_select %p201, %s200, 4
          %s203 = smul.u32 64, %s202
          %s204 = smul.u32 %s203, 4
          %s206 = ssub.s32 1024, %s204
          %207 = vsyncadd %s195, %s206
          %p208 = scmp.ne.s32.totalorder 0, %s204
          %s209 = smul.addr %s199, 4
          %s210 = smul.addr %s209, 64
          %s211 = scalar_lea.hbm %s0, %s210
          %s212 = smul.u32 16, %s202
          %s213 = sshll.u32 %s198, 4
          %s214 = int_to_ptr.vmem [resolvable:$true] %s213
          %s215 = sshll.u32 %s212, 4
          %219 = dma.hbm_to_vmem [thread:$0]  (%p208), %s211, %s215, %s214, %s195, 256, 256, 16
        $region32: #{tpu_custom_call.1} parent=27 // pred_fallthru
          _
      $region28: #{tpu_custom_call.1} parent=5 // pred_fallthru
        _
      %p220 = scmp.le.s32.totalorder 1, %s18
      %p221 = scmp.lt.s32.totalorder %s18, 3
      %p222 = pnand %p220, %p221
      %p223 = pneg %p222
      // Predicated region
      $region33: #{tpu_custom_call.1} parent=5 // pred_check
        _
      $region34: #{tpu_custom_call.1} parent=5 // pred_check_branch
        %225 = sbr.rel (%p222) target = $region36
      $region35: #{tpu_custom_call.1} parent=5 // pred_region
        %s226 = ssub.s32 %s18, 1
        %s227 = sand.u32 %s31, 1
        %s228 = scalar_lea.sflag [#allocation3], %s227
        %s229 = sand.u32 %s31, 1
        %s230 = smul.addr %s229, 64
        %s231 = scalar_lea.vmem [#allocation2], %s230
        // Predicated region
        $region37: #{tpu_custom_call.1} parent=35 // pred_check
          %p232 = pneg %p44
        $region38: #{tpu_custom_call.1} parent=35 // pred_check_branch
          %234 = sbr.rel (%p232) target = $region40
        $region39: #{tpu_custom_call.1} parent=35 // pred_region
          %235 = dma.done %s228, 1024
        $region40: #{tpu_custom_call.1} parent=35 // pred_fallthru
          _
        // Predicated region
        $region41: #{tpu_custom_call.1} parent=35 // pred_check
          %p236 = pneg %p65
        $region42: #{tpu_custom_call.1} parent=35 // pred_check_branch
          %238 = sbr.rel (%p236) target = $region44
        $region43: #{tpu_custom_call.1} parent=35 // pred_region
          %239 = dma.done [#allocation6], 8192
        $region44: #{tpu_custom_call.1} parent=35 // pred_fallthru
          _
        // Predicated region
        $region45: #{tpu_custom_call.1} parent=35 // pred_check
          %p240 = pneg %p86
        $region46: #{tpu_custom_call.1} parent=35 // pred_check_branch
          %242 = sbr.rel (%p240) target = $region48
        $region47: #{tpu_custom_call.1} parent=35 // pred_region
          %243 = dma.done [#allocation6], 8192
        $region48: #{tpu_custom_call.1} parent=35 // pred_fallthru
          _
        // Predicated region
        $region49: #{tpu_custom_call.1} parent=35 // pred_check
          %p244 = pneg %p107
        $region50: #{tpu_custom_call.1} parent=35 // pred_check_branch
          %246 = sbr.rel (%p244) target = $region52
        $region51: #{tpu_custom_call.1} parent=35 // pred_region
          %247 = dma.done [#allocation9], 4096
        $region52: #{tpu_custom_call.1} parent=35 // pred_fallthru
          _
        %s248 = sand.u32 %s31, 1
        %s249 = scalar_lea.sflag [#allocation3], %s248
        %s250 = sand.u32 %s31, 1
        %s251 = smul.addr %s250, 64
        %s252 = scalar_lea.vmem [#allocation2], %s251
        %p253 = pneg %p44
        %p254 = pneg %p41
        %p255 = pneg %p65
        %p256 = pneg %p62
        %p257 = pneg %p86
        %p258 = pneg %p83
        %p259 = pneg %p107
        %p260 = pneg %p104
        %p261 = pneg %p133
        %p262 = pneg %p130
        %s263 = sand.u32 %s120, 1
        %s264 = scalar_lea.sflag [#allocation4], %s263
        %s265 = sand.u32 %s120, 1
        %s266 = smul.addr %s265, 32
        %s267 = scalar_lea.vmem [#allocation10], %s266
        %s268 = smul.u32 4, %s23
        %s269 = ssub.s32 5, %s268
        %p270 = scmp.lt.s32.totalorder %s269, 4
        %s271 = scalar_select %p270, %s269, 4
        %s272 = smul.u32 64, %s271
        %s273 = smul.u32 %s272, 4
        %s274 = smul.u32 4, %s23
        %s275 = ssub.s32 5, %s274
        %p276 = scmp.lt.s32.totalorder %s275, 4
        %s277 = scalar_select %p276, %s275, 4
        %s278 = smul.u32 128, %s277
        %v280 = vld [vmem:[%s231] sm:$0xff]
        %v281 = vld [vmem:[%s231 + $0x8] sm:$0xff]
        %v282 = vld [vmem:[%s231 + $0x10] sm:$0xff]
        %v283 = vld [vmem:[%s231 + $0x18] sm:$0xff]
        %v284 = vld [vmem:[%s231 + $0x20] sm:$0xff]
        %v285 = vld [vmem:[%s231 + $0x28] sm:$0xff]
        %v286 = vld [vmem:[%s231 + $0x30] sm:$0xff]
        %v287 = vld [vmem:[%s231 + $0x38] sm:$0xff]
        %v288 = vunpack.c.l.bf16 %v280
        %v289 = vunpack.c.h.bf16 %v280
        %v290 = vunpack.c.l.bf16 %v281
        %v291 = vunpack.c.h.bf16 %v281
        %v292 = vunpack.c.l.bf16 %v282
        %v293 = vunpack.c.h.bf16 %v282
        %v294 = vunpack.c.l.bf16 %v283
        %v295 = vunpack.c.h.bf16 %v283
        %v296 = vunpack.c.l.bf16 %v284
        %v297 = vunpack.c.h.bf16 %v284
        %v298 = vunpack.c.l.bf16 %v285
        %v299 = vunpack.c.h.bf16 %v285
        %v300 = vunpack.c.l.bf16 %v286
        %v301 = vunpack.c.h.bf16 %v286
        %v302 = vunpack.c.l.bf16 %v287
        %v303 = vunpack.c.h.bf16 %v287
        %v304 = vld [vmem:[#allocation5] sm:$0xff]
        %v305 = vld [vmem:[#allocation5 + $0x8] sm:$0xff]
        %v306 = vld [vmem:[#allocation5 + $0x10] sm:$0xff]
        %v307 = vld [vmem:[#allocation5 + $0x18] sm:$0xff]
        %v308 = vld [vmem:[#allocation5 + $0x20] sm:$0xff]
        %v309 = vld [vmem:[#allocation5 + $0x28] sm:$0xff]
        %v310 = vld [vmem:[#allocation5 + $0x30] sm:$0xff]
        %v311 = vld [vmem:[#allocation5 + $0x38] sm:$0xff]
        %v312 = vld [vmem:[#allocation5 + $0x40] sm:$0xff]
        %v313 = vld [vmem:[#allocation5 + $0x48] sm:$0xff]
        %v314 = vld [vmem:[#allocation5 + $0x50] sm:$0xff]
        %v315 = vld [vmem:[#allocation5 + $0x58] sm:$0xff]
        %v316 = vld [vmem:[#allocation5 + $0x60] sm:$0xff]
        %v317 = vld [vmem:[#allocation5 + $0x68] sm:$0xff]
        %v318 = vld [vmem:[#allocation5 + $0x70] sm:$0xff]
        %v319 = vld [vmem:[#allocation5 + $0x78] sm:$0xff]
        %v320 = vld [vmem:[#allocation5 + $0x80] sm:$0xff]
        %v321 = vld [vmem:[#allocation5 + $0x88] sm:$0xff]
        %v322 = vld [vmem:[#allocation5 + $0x90] sm:$0xff]
        %v323 = vld [vmem:[#allocation5 + $0x98] sm:$0xff]
        %v324 = vld [vmem:[#allocation5 + $0xa0] sm:$0xff]
        %v325 = vld [vmem:[#allocation5 + $0xa8] sm:$0xff]
        %v326 = vld [vmem:[#allocation5 + $0xb0] sm:$0xff]
        %v327 = vld [vmem:[#allocation5 + $0xb8] sm:$0xff]
        %v328 = vld [vmem:[#allocation5 + $0xc0] sm:$0xff]
        %v329 = vld [vmem:[#allocation5 + $0xc8] sm:$0xff]
        %v330 = vld [vmem:[#allocation5 + $0xd0] sm:$0xff]
        %v331 = vld [vmem:[#allocation5 + $0xd8] sm:$0xff]
        %v332 = vld [vmem:[#allocation5 + $0xe0] sm:$0xff]
        %v333 = vld [vmem:[#allocation5 + $0xe8] sm:$0xff]
        %v334 = vld [vmem:[#allocation5 + $0xf0] sm:$0xff]
        %v335 = vld [vmem:[#allocation5 + $0xf8] sm:$0xff]
        %v336 = vld [vmem:[#allocation5 + $0x100] sm:$0xff]
        %v337 = vld [vmem:[#allocation5 + $0x108] sm:$0xff]
        %v338 = vld [vmem:[#allocation5 + $0x110] sm:$0xff]
        %v339 = vld [vmem:[#allocation5 + $0x118] sm:$0xff]
        %v340 = vld [vmem:[#allocation5 + $0x120] sm:$0xff]
        %v341 = vld [vmem:[#allocation5 + $0x128] sm:$0xff]
        %v342 = vld [vmem:[#allocation5 + $0x130] sm:$0xff]
        %v343 = vld [vmem:[#allocation5 + $0x138] sm:$0xff]
        %v344 = vld [vmem:[#allocation5 + $0x140] sm:$0xff]
        %v345 = vld [vmem:[#allocation5 + $0x148] sm:$0xff]
        %v346 = vld [vmem:[#allocation5 + $0x150] sm:$0xff]
        %v347 = vld [vmem:[#allocation5 + $0x158] sm:$0xff]
        %v348 = vld [vmem:[#allocation5 + $0x160] sm:$0xff]
        %v349 = vld [vmem:[#allocation5 + $0x168] sm:$0xff]
        %v350 = vld [vmem:[#allocation5 + $0x170] sm:$0xff]
        %v351 = vld [vmem:[#allocation5 + $0x178] sm:$0xff]
        %v352 = vld [vmem:[#allocation5 + $0x180] sm:$0xff]
        %v353 = vld [vmem:[#allocation5 + $0x188] sm:$0xff]
        %v354 = vld [vmem:[#allocation5 + $0x190] sm:$0xff]
        %v355 = vld [vmem:[#allocation5 + $0x198] sm:$0xff]
        %v356 = vld [vmem:[#allocation5 + $0x1a0] sm:$0xff]
        %v357 = vld [vmem:[#allocation5 + $0x1a8] sm:$0xff]
        %v358 = vld [vmem:[#allocation5 + $0x1b0] sm:$0xff]
        %v359 = vld [vmem:[#allocation5 + $0x1b8] sm:$0xff]
        %v360 = vld [vmem:[#allocation5 + $0x1c0] sm:$0xff]
        %v361 = vld [vmem:[#allocation5 + $0x1c8] sm:$0xff]
        %v362 = vld [vmem:[#allocation5 + $0x1d0] sm:$0xff]
        %v363 = vld [vmem:[#allocation5 + $0x1d8] sm:$0xff]
        %v364 = vld [vmem:[#allocation5 + $0x1e0] sm:$0xff]
        %v365 = vld [vmem:[#allocation5 + $0x1e8] sm:$0xff]
        %v366 = vld [vmem:[#allocation5 + $0x1f0] sm:$0xff]
        %v367 = vld [vmem:[#allocation5 + $0x1f8] sm:$0xff]
        %v372 = vunpack.c.l.b16 %v280
        %v373 = vunpack.c.h.b16 %v280
        %v374 = vunpack.c.l.b16 %v282
        %v375 = vunpack.c.h.b16 %v282
        %v376 = vunpack.c.l.b16 %v284
        %v377 = vunpack.c.h.b16 %v284
        %v378 = vunpack.c.l.b16 %v286
        %v379 = vunpack.c.h.b16 %v286
        %v380 = vpack.c.b16 %v374, %v372
        %v381 = vpack.c.b16 %v375, %v373
        %v382 = vpack.c.b16 %v378, %v376
        %v383 = vpack.c.b16 %v379, %v377
        %v452 = vunpack.c.l.b16 %v304
        %v453 = vunpack.c.h.b16 %v304
        %v454 = vunpack.c.l.b16 %v305
        %v455 = vunpack.c.h.b16 %v305
        %v456 = vunpack.c.l.b16 %v306
        %v457 = vunpack.c.h.b16 %v306
        %v458 = vunpack.c.l.b16 %v307
        %v459 = vunpack.c.h.b16 %v307
        %v460 = vunpack.c.l.b16 %v308
        %v461 = vunpack.c.h.b16 %v308
        %v462 = vunpack.c.l.b16 %v309
        %v463 = vunpack.c.h.b16 %v309
        %v464 = vunpack.c.l.b16 %v310
        %v465 = vunpack.c.h.b16 %v310
        %v466 = vunpack.c.l.b16 %v311
        %v467 = vunpack.c.h.b16 %v311
        %v468 = vunpack.c.l.b16 %v312
        %v469 = vunpack.c.h.b16 %v312
        %v470 = vunpack.c.l.b16 %v313
        %v471 = vunpack.c.h.b16 %v313
        %v472 = vunpack.c.l.b16 %v314
        %v473 = vunpack.c.h.b16 %v314
        %v474 = vunpack.c.l.b16 %v315
        %v475 = vunpack.c.h.b16 %v315
        %v476 = vunpack.c.l.b16 %v316
        %v477 = vunpack.c.h.b16 %v316
        %v478 = vunpack.c.l.b16 %v317
        %v479 = vunpack.c.h.b16 %v317
        %v480 = vunpack.c.l.b16 %v318
        %v481 = vunpack.c.h.b16 %v318
        %v482 = vunpack.c.l.b16 %v319
        %v483 = vunpack.c.h.b16 %v319
        %v484 = vunpack.c.l.b16 %v320
        %v485 = vunpack.c.h.b16 %v320
        %v486 = vunpack.c.l.b16 %v321
        %v487 = vunpack.c.h.b16 %v321
        %v488 = vunpack.c.l.b16 %v322
        %v489 = vunpack.c.h.b16 %v322
        %v490 = vunpack.c.l.b16 %v323
        %v491 = vunpack.c.h.b16 %v323
        %v492 = vunpack.c.l.b16 %v324
        %v493 = vunpack.c.h.b16 %v324
        %v494 = vunpack.c.l.b16 %v325
        %v495 = vunpack.c.h.b16 %v325
        %v496 = vunpack.c.l.b16 %v326
        %v497 = vunpack.c.h.b16 %v326
        %v498 = vunpack.c.l.b16 %v327
        %v499 = vunpack.c.h.b16 %v327
        %v500 = vunpack.c.l.b16 %v328
        %v501 = vunpack.c.h.b16 %v328
        %v502 = vunpack.c.l.b16 %v329
        %v503 = vunpack.c.h.b16 %v329
        %v504 = vunpack.c.l.b16 %v330
        %v505 = vunpack.c.h.b16 %v330
        %v506 = vunpack.c.l.b16 %v331
        %v507 = vunpack.c.h.b16 %v331
        %v508 = vunpack.c.l.b16 %v332
        %v509 = vunpack.c.h.b16 %v332
        %v510 = vunpack.c.l.b16 %v333
        %v511 = vunpack.c.h.b16 %v333
        %v512 = vunpack.c.l.b16 %v334
        %v513 = vunpack.c.h.b16 %v334
        %v514 = vunpack.c.l.b16 %v335
        %v515 = vunpack.c.h.b16 %v335
        %v516 = vunpack.c.l.b16 %v336
        %v517 = vunpack.c.h.b16 %v336
        %v518 = vunpack.c.l.b16 %v337
        %v519 = vunpack.c.h.b16 %v337
        %v520 = vunpack.c.l.b16 %v338
        %v521 = vunpack.c.h.b16 %v338
        %v522 = vunpack.c.l.b16 %v339
        %v523 = vunpack.c.h.b16 %v339
        %v524 = vunpack.c.l.b16 %v340
        %v525 = vunpack.c.h.b16 %v340
        %v526 = vunpack.c.l.b16 %v341
        %v527 = vunpack.c.h.b16 %v341
        %v528 = vunpack.c.l.b16 %v342
        %v529 = vunpack.c.h.b16 %v342
        %v530 = vunpack.c.l.b16 %v343
        %v531 = vunpack.c.h.b16 %v343
        %v532 = vunpack.c.l.b16 %v344
        %v533 = vunpack.c.h.b16 %v344
        %v534 = vunpack.c.l.b16 %v345
        %v535 = vunpack.c.h.b16 %v345
        %v536 = vunpack.c.l.b16 %v346
        %v537 = vunpack.c.h.b16 %v346
        %v538 = vunpack.c.l.b16 %v347
        %v539 = vunpack.c.h.b16 %v347
        %v540 = vunpack.c.l.b16 %v348
        %v541 = vunpack.c.h.b16 %v348
        %v542 = vunpack.c.l.b16 %v349
        %v543 = vunpack.c.h.b16 %v349
        %v544 = vunpack.c.l.b16 %v350
        %v545 = vunpack.c.h.b16 %v350
        %v546 = vunpack.c.l.b16 %v351
        %v547 = vunpack.c.h.b16 %v351
        %v548 = vunpack.c.l.b16 %v352
        %v549 = vunpack.c.h.b16 %v352
        %v550 = vunpack.c.l.b16 %v353
        %v551 = vunpack.c.h.b16 %v353
        %v552 = vunpack.c.l.b16 %v354
        %v553 = vunpack.c.h.b16 %v354
        %v554 = vunpack.c.l.b16 %v355
        %v555 = vunpack.c.h.b16 %v355
        %v556 = vunpack.c.l.b16 %v356
        %v557 = vunpack.c.h.b16 %v356
        %v558 = vunpack.c.l.b16 %v357
        %v559 = vunpack.c.h.b16 %v357
        %v560 = vunpack.c.l.b16 %v358
        %v561 = vunpack.c.h.b16 %v358
        %v562 = vunpack.c.l.b16 %v359
        %v563 = vunpack.c.h.b16 %v359
        %v564 = vunpack.c.l.b16 %v360
        %v565 = vunpack.c.h.b16 %v360
        %v566 = vunpack.c.l.b16 %v361
        %v567 = vunpack.c.h.b16 %v361
        %v568 = vunpack.c.l.b16 %v362
        %v569 = vunpack.c.h.b16 %v362
        %v570 = vunpack.c.l.b16 %v363
        %v571 = vunpack.c.h.b16 %v363
        %v572 = vunpack.c.l.b16 %v364
        %v573 = vunpack.c.h.b16 %v364
        %v574 = vunpack.c.l.b16 %v365
        %v575 = vunpack.c.h.b16 %v365
        %v576 = vunpack.c.l.b16 %v366
        %v577 = vunpack.c.h.b16 %v366
        %v578 = vunpack.c.l.b16 %v367
        %v579 = vunpack.c.h.b16 %v367
        %v580 = vpack.c.b16 %v456, %v452
        %v581 = vpack.c.b16 %v457, %v453
        %v582 = vpack.c.b16 %v458, %v454
        %v583 = vpack.c.b16 %v459, %v455
        %v584 = vpack.c.b16 %v464, %v460
        %v585 = vpack.c.b16 %v465, %v461
        %v586 = vpack.c.b16 %v466, %v462
        %v587 = vpack.c.b16 %v467, %v463
        %v588 = vpack.c.b16 %v472, %v468
        %v589 = vpack.c.b16 %v473, %v469
        %v590 = vpack.c.b16 %v474, %v470
        %v591 = vpack.c.b16 %v475, %v471
        %v592 = vpack.c.b16 %v480, %v476
        %v593 = vpack.c.b16 %v481, %v477
        %v594 = vpack.c.b16 %v482, %v478
        %v595 = vpack.c.b16 %v483, %v479
        %v596 = vpack.c.b16 %v488, %v484
        %v597 = vpack.c.b16 %v489, %v485
        %v598 = vpack.c.b16 %v490, %v486
        %v599 = vpack.c.b16 %v491, %v487
        %v600 = vpack.c.b16 %v496, %v492
        %v601 = vpack.c.b16 %v497, %v493
        %v602 = vpack.c.b16 %v498, %v494
        %v603 = vpack.c.b16 %v499, %v495
        %v604 = vpack.c.b16 %v504, %v500
        %v605 = vpack.c.b16 %v505, %v501
        %v606 = vpack.c.b16 %v506, %v502
        %v607 = vpack.c.b16 %v507, %v503
        %v608 = vpack.c.b16 %v512, %v508
        %v609 = vpack.c.b16 %v513, %v509
        %v610 = vpack.c.b16 %v514, %v510
        %v611 = vpack.c.b16 %v515, %v511
        %v612 = vpack.c.b16 %v520, %v516
        %v613 = vpack.c.b16 %v521, %v517
        %v614 = vpack.c.b16 %v522, %v518
        %v615 = vpack.c.b16 %v523, %v519
        %v616 = vpack.c.b16 %v528, %v524
        %v617 = vpack.c.b16 %v529, %v525
        %v618 = vpack.c.b16 %v530, %v526
        %v619 = vpack.c.b16 %v531, %v527
        %v620 = vpack.c.b16 %v536, %v532
        %v621 = vpack.c.b16 %v537, %v533
        %v622 = vpack.c.b16 %v538, %v534
        %v623 = vpack.c.b16 %v539, %v535
        %v624 = vpack.c.b16 %v544, %v540
        %v625 = vpack.c.b16 %v545, %v541
        %v626 = vpack.c.b16 %v546, %v542
        %v627 = vpack.c.b16 %v547, %v543
        %v628 = vpack.c.b16 %v552, %v548
        %v629 = vpack.c.b16 %v553, %v549
        %v630 = vpack.c.b16 %v554, %v550
        %v631 = vpack.c.b16 %v555, %v551
        %v632 = vpack.c.b16 %v560, %v556
        %v633 = vpack.c.b16 %v561, %v557
        %v634 = vpack.c.b16 %v562, %v558
        %v635 = vpack.c.b16 %v563, %v559
        %v636 = vpack.c.b16 %v568, %v564
        %v637 = vpack.c.b16 %v569, %v565
        %v638 = vpack.c.b16 %v570, %v566
        %v639 = vpack.c.b16 %v571, %v567
        %v640 = vpack.c.b16 %v576, %v572
        %v641 = vpack.c.b16 %v577, %v573
        %v642 = vpack.c.b16 %v578, %v574
        %v643 = vpack.c.b16 %v579, %v575
        %708 = vmatprep.subr.bf16.mxu0 %v581
        %709 = vmatpush1.bf16.msra.mxu0 %v580
        %710 = vmatprep.subr.bf16.mxu0 %v585
        %711 = vmatpush1.bf16.msra.mxu0 %v584
        %712 = vmatprep.subr.bf16.mxu0 %v589
        %713 = vmatpush1.bf16.msra.mxu0 %v588
        %714 = vmatprep.subr.bf16.mxu0 %v593
        %715 = vmatpush1.bf16.msra.mxu0 %v592
        %716 = vmatprep.subr.bf16.mxu0 %v597
        %717 = vmatpush1.bf16.msra.mxu0 %v596
        %718 = vmatprep.subr.bf16.mxu0 %v601
        %719 = vmatpush1.bf16.msra.mxu0 %v600
        %720 = vmatprep.subr.bf16.mxu0 %v605
        %721 = vmatpush1.bf16.msra.mxu0 %v604
        %722 = vmatprep.subr.bf16.mxu0 %v609
        %723 = vmatpush1.bf16.msra.mxu0 %v608
        %724 = vmatprep.subr.bf16.mxu0 %v613
        %725 = vmatpush1.bf16.msra.mxu0 %v612
        %726 = vmatprep.subr.bf16.mxu0 %v617
        %727 = vmatpush1.bf16.msra.mxu0 %v616
        %728 = vmatprep.subr.bf16.mxu0 %v621
        %729 = vmatpush1.bf16.msra.mxu0 %v620
        %730 = vmatprep.subr.bf16.mxu0 %v625
        %731 = vmatpush1.bf16.msra.mxu0 %v624
        %732 = vmatprep.subr.bf16.mxu0 %v629
        %733 = vmatpush1.bf16.msra.mxu0 %v628
        %734 = vmatprep.subr.bf16.mxu0 %v633
        %735 = vmatpush1.bf16.msra.mxu0 %v632
        %736 = vmatprep.subr.bf16.mxu0 %v637
        %737 = vmatpush1.bf16.msra.mxu0 %v636
        %738 = vmatprep.subr.bf16.mxu0 %v641
        %739 = vmatpush1.bf16.msra.mxu0 %v640
        %740 = vmatprep.mubr.bf16.mxu0 %v381
        %741 = vmatmul.mubr.bf16.gmra.mrb[0].mxu0 %v380
        %v742 = vpop.f32.mrb[0].mxu0
        %v743 = vadd.f32 0.0, %v742
        %v744 = vpop.f32.mrb[0].mxu0
        %v745 = vadd.f32 0.0, %v744
        %v746 = vpop.f32.mrb[0].mxu0
        %v747 = vadd.f32 0.0, %v746
        %v748 = vpop.f32.mrb[0].mxu0
        %v749 = vadd.f32 0.0, %v748
        %750 = vmatprep.mubr.bf16.mxu0 %v383
        %751 = vmatmul.mubr.bf16.gmra.mrb[0].mxu0 %v382
        %v752 = vpop.f32.mrb[0].mxu0
        %v753 = vadd.f32 0.0, %v752
        %v754 = vpop.f32.mrb[0].mxu0
        %v755 = vadd.f32 0.0, %v754
        %v756 = vpop.f32.mrb[0].mxu0
        %v757 = vadd.f32 0.0, %v756
        %v758 = vpop.f32.mrb[0].mxu0
        %v759 = vadd.f32 0.0, %v758
        %760 = vdwg.mxu0
        %761 = vmatprep.subr.bf16.mxu0 %v583
        %762 = vmatpush1.bf16.msra.mxu0 %v582
        %763 = vmatprep.subr.bf16.mxu0 %v587
        %764 = vmatpush1.bf16.msra.mxu0 %v586
        %765 = vmatprep.subr.bf16.mxu0 %v591
        %766 = vmatpush1.bf16.msra.mxu0 %v590
        %767 = vmatprep.subr.bf16.mxu0 %v595
        %768 = vmatpush1.bf16.msra.mxu0 %v594
        %769 = vmatprep.subr.bf16.mxu0 %v599
        %770 = vmatpush1.bf16.msra.mxu0 %v598
        %771 = vmatprep.subr.bf16.mxu0 %v603
        %772 = vmatpush1.bf16.msra.mxu0 %v602
        %773 = vmatprep.subr.bf16.mxu0 %v607
        %774 = vmatpush1.bf16.msra.mxu0 %v606
        %775 = vmatprep.subr.bf16.mxu0 %v611
        %776 = vmatpush1.bf16.msra.mxu0 %v610
        %777 = vmatprep.subr.bf16.mxu0 %v615
        %778 = vmatpush1.bf16.msra.mxu0 %v614
        %779 = vmatprep.subr.bf16.mxu0 %v619
        %780 = vmatpush1.bf16.msra.mxu0 %v618
        %781 = vmatprep.subr.bf16.mxu0 %v623
        %782 = vmatpush1.bf16.msra.mxu0 %v622
        %783 = vmatprep.subr.bf16.mxu0 %v627
        %784 = vmatpush1.bf16.msra.mxu0 %v626
        %785 = vmatprep.subr.bf16.mxu0 %v631
        %786 = vmatpush1.bf16.msra.mxu0 %v630
        %787 = vmatprep.subr.bf16.mxu0 %v635
        %788 = vmatpush1.bf16.msra.mxu0 %v634
        %789 = vmatprep.subr.bf16.mxu0 %v639
        %790 = vmatpush1.bf16.msra.mxu0 %v638
        %791 = vmatprep.subr.bf16.mxu0 %v643
        %792 = vmatpush1.bf16.msra.mxu0 %v642
        %793 = vmatprep.mubr.bf16.mxu0 %v381
        %794 = vmatmul.mubr.bf16.gmra.mrb[0].mxu0 %v380
        %v795 = vpop.f32.mrb[0].mxu0
        %v796 = vadd.f32 0.0, %v795
        %v797 = vpop.f32.mrb[0].mxu0
        %v798 = vadd.f32 0.0, %v797
        %v799 = vpop.f32.mrb[0].mxu0
        %v800 = vadd.f32 0.0, %v799
        %v801 = vpop.f32.mrb[0].mxu0
        %v802 = vadd.f32 0.0, %v801
        %803 = vmatprep.mubr.bf16.mxu0 %v383
        %804 = vmatmul.mubr.bf16.gmra.mrb[0].mxu0 %v382
        %v805 = vpop.f32.mrb[0].mxu0
        %v806 = vadd.f32 0.0, %v805
        %v807 = vpop.f32.mrb[0].mxu0
        %v808 = vadd.f32 0.0, %v807
        %v809 = vpop.f32.mrb[0].mxu0
        %v810 = vadd.f32 0.0, %v809
        %v811 = vpop.f32.mrb[0].mxu0
        %v812 = vadd.f32 0.0, %v811
        %813 = vdwg.mxu0
        %v814 = vmax.f32 %v743, 0.0
        %v815 = vmax.f32 %v745, 0.0
        %v816 = vmax.f32 %v796, 0.0
        %v817 = vmax.f32 %v798, 0.0
        %v818 = vmax.f32 %v747, 0.0
        %v819 = vmax.f32 %v749, 0.0
        %v820 = vmax.f32 %v800, 0.0
        %v821 = vmax.f32 %v802, 0.0
        %v822 = vmax.f32 %v753, 0.0
        %v823 = vmax.f32 %v755, 0.0
        %v824 = vmax.f32 %v806, 0.0
        %v825 = vmax.f32 %v808, 0.0
        %v826 = vmax.f32 %v757, 0.0
        %v827 = vmax.f32 %v759, 0.0
        %v828 = vmax.f32 %v810, 0.0
        %v829 = vmax.f32 %v812, 0.0
        %v830 = vpack.c.bf16 %v818, %v814
        %v831 = vpack.c.bf16 %v819, %v815
        %v832 = vpack.c.bf16 %v820, %v816
        %v833 = vpack.c.bf16 %v821, %v817
        %v834 = vpack.c.bf16 %v826, %v822
        %v835 = vpack.c.bf16 %v827, %v823
        %v836 = vpack.c.bf16 %v828, %v824
        %v837 = vpack.c.bf16 %v829, %v825
        %v838 = vld [vmem:[#allocation7] sm:$0xff]
        %v839 = vld [vmem:[#allocation7 + $0x8] sm:$0xff]
        %v840 = vld [vmem:[#allocation7 + $0x10] sm:$0xff]
        %v841 = vld [vmem:[#allocation7 + $0x18] sm:$0xff]
        %v842 = vld [vmem:[#allocation7 + $0x20] sm:$0xff]
        %v843 = vld [vmem:[#allocation7 + $0x28] sm:$0xff]
        %v844 = vld [vmem:[#allocation7 + $0x30] sm:$0xff]
        %v845 = vld [vmem:[#allocation7 + $0x38] sm:$0xff]
        %v846 = vld [vmem:[#allocation7 + $0x40] sm:$0xff]
        %v847 = vld [vmem:[#allocation7 + $0x48] sm:$0xff]
        %v848 = vld [vmem:[#allocation7 + $0x50] sm:$0xff]
        %v849 = vld [vmem:[#allocation7 + $0x58] sm:$0xff]
        %v850 = vld [vmem:[#allocation7 + $0x60] sm:$0xff]
        %v851 = vld [vmem:[#allocation7 + $0x68] sm:$0xff]
        %v852 = vld [vmem:[#allocation7 + $0x70] sm:$0xff]
        %v853 = vld [vmem:[#allocation7 + $0x78] sm:$0xff]
        %v854 = vld [vmem:[#allocation7 + $0x80] sm:$0xff]
        %v855 = vld [vmem:[#allocation7 + $0x88] sm:$0xff]
        %v856 = vld [vmem:[#allocation7 + $0x90] sm:$0xff]
        %v857 = vld [vmem:[#allocation7 + $0x98] sm:$0xff]
        %v858 = vld [vmem:[#allocation7 + $0xa0] sm:$0xff]
        %v859 = vld [vmem:[#allocation7 + $0xa8] sm:$0xff]
        %v860 = vld [vmem:[#allocation7 + $0xb0] sm:$0xff]
        %v861 = vld [vmem:[#allocation7 + $0xb8] sm:$0xff]
        %v862 = vld [vmem:[#allocation7 + $0xc0] sm:$0xff]
        %v863 = vld [vmem:[#allocation7 + $0xc8] sm:$0xff]
        %v864 = vld [vmem:[#allocation7 + $0xd0] sm:$0xff]
        %v865 = vld [vmem:[#allocation7 + $0xd8] sm:$0xff]
        %v866 = vld [vmem:[#allocation7 + $0xe0] sm:$0xff]
        %v867 = vld [vmem:[#allocation7 + $0xe8] sm:$0xff]
        %v868 = vld [vmem:[#allocation7 + $0xf0] sm:$0xff]
        %v869 = vld [vmem:[#allocation7 + $0xf8] sm:$0xff]
        %v870 = vld [vmem:[#allocation7 + $0x100] sm:$0xff]
        %v871 = vld [vmem:[#allocation7 + $0x108] sm:$0xff]
        %v872 = vld [vmem:[#allocation7 + $0x110] sm:$0xff]
        %v873 = vld [vmem:[#allocation7 + $0x118] sm:$0xff]
        %v874 = vld [vmem:[#allocation7 + $0x120] sm:$0xff]
        %v875 = vld [vmem:[#allocation7 + $0x128] sm:$0xff]
        %v876 = vld [vmem:[#allocation7 + $0x130] sm:$0xff]
        %v877 = vld [vmem:[#allocation7 + $0x138] sm:$0xff]
        %v878 = vld [vmem:[#allocation7 + $0x140] sm:$0xff]
        %v879 = vld [vmem:[#allocation7 + $0x148] sm:$0xff]
        %v880 = vld [vmem:[#allocation7 + $0x150] sm:$0xff]
        %v881 = vld [vmem:[#allocation7 + $0x158] sm:$0xff]
        %v882 = vld [vmem:[#allocation7 + $0x160] sm:$0xff]
        %v883 = vld [vmem:[#allocation7 + $0x168] sm:$0xff]
        %v884 = vld [vmem:[#allocation7 + $0x170] sm:$0xff]
        %v885 = vld [vmem:[#allocation7 + $0x178] sm:$0xff]
        %v886 = vld [vmem:[#allocation7 + $0x180] sm:$0xff]
        %v887 = vld [vmem:[#allocation7 + $0x188] sm:$0xff]
        %v888 = vld [vmem:[#allocation7 + $0x190] sm:$0xff]
        %v889 = vld [vmem:[#allocation7 + $0x198] sm:$0xff]
        %v890 = vld [vmem:[#allocation7 + $0x1a0] sm:$0xff]
        %v891 = vld [vmem:[#allocation7 + $0x1a8] sm:$0xff]
        %v892 = vld [vmem:[#allocation7 + $0x1b0] sm:$0xff]
        %v893 = vld [vmem:[#allocation7 + $0x1b8] sm:$0xff]
        %v894 = vld [vmem:[#allocation7 + $0x1c0] sm:$0xff]
        %v895 = vld [vmem:[#allocation7 + $0x1c8] sm:$0xff]
        %v896 = vld [vmem:[#allocation7 + $0x1d0] sm:$0xff]
        %v897 = vld [vmem:[#allocation7 + $0x1d8] sm:$0xff]
        %v898 = vld [vmem:[#allocation7 + $0x1e0] sm:$0xff]
        %v899 = vld [vmem:[#allocation7 + $0x1e8] sm:$0xff]
        %v900 = vld [vmem:[#allocation7 + $0x1f0] sm:$0xff]
        %v901 = vld [vmem:[#allocation7 + $0x1f8] sm:$0xff]
        %v966 = vunpack.c.l.b16 %v838
        %v967 = vunpack.c.h.b16 %v838
        %v968 = vunpack.c.l.b16 %v839
        %v969 = vunpack.c.h.b16 %v839
        %v970 = vunpack.c.l.b16 %v840
        %v971 = vunpack.c.h.b16 %v840
        %v972 = vunpack.c.l.b16 %v841
        %v973 = vunpack.c.h.b16 %v841
        %v974 = vunpack.c.l.b16 %v842
        %v975 = vunpack.c.h.b16 %v842
        %v976 = vunpack.c.l.b16 %v843
        %v977 = vunpack.c.h.b16 %v843
        %v978 = vunpack.c.l.b16 %v844
        %v979 = vunpack.c.h.b16 %v844
        %v980 = vunpack.c.l.b16 %v845
        %v981 = vunpack.c.h.b16 %v845
        %v982 = vunpack.c.l.b16 %v846
        %v983 = vunpack.c.h.b16 %v846
        %v984 = vunpack.c.l.b16 %v847
        %v985 = vunpack.c.h.b16 %v847
        %v986 = vunpack.c.l.b16 %v848
        %v987 = vunpack.c.h.b16 %v848
        %v988 = vunpack.c.l.b16 %v849
        %v989 = vunpack.c.h.b16 %v849
        %v990 = vunpack.c.l.b16 %v850
        %v991 = vunpack.c.h.b16 %v850
        %v992 = vunpack.c.l.b16 %v851
        %v993 = vunpack.c.h.b16 %v851
        %v994 = vunpack.c.l.b16 %v852
        %v995 = vunpack.c.h.b16 %v852
        %v996 = vunpack.c.l.b16 %v853
        %v997 = vunpack.c.h.b16 %v853
        %v998 = vunpack.c.l.b16 %v854
        %v999 = vunpack.c.h.b16 %v854
        %v1000 = vunpack.c.l.b16 %v855
        %v1001 = vunpack.c.h.b16 %v855
        %v1002 = vunpack.c.l.b16 %v856
        %v1003 = vunpack.c.h.b16 %v856
        %v1004 = vunpack.c.l.b16 %v857
        %v1005 = vunpack.c.h.b16 %v857
        %v1006 = vunpack.c.l.b16 %v858
        %v1007 = vunpack.c.h.b16 %v858
        %v1008 = vunpack.c.l.b16 %v859
        %v1009 = vunpack.c.h.b16 %v859
        %v1010 = vunpack.c.l.b16 %v860
        %v1011 = vunpack.c.h.b16 %v860
        %v1012 = vunpack.c.l.b16 %v861
        %v1013 = vunpack.c.h.b16 %v861
        %v1014 = vunpack.c.l.b16 %v862
        %v1015 = vunpack.c.h.b16 %v862
        %v1016 = vunpack.c.l.b16 %v863
        %v1017 = vunpack.c.h.b16 %v863
        %v1018 = vunpack.c.l.b16 %v864
        %v1019 = vunpack.c.h.b16 %v864
        %v1020 = vunpack.c.l.b16 %v865
        %v1021 = vunpack.c.h.b16 %v865
        %v1022 = vunpack.c.l.b16 %v866
        %v1023 = vunpack.c.h.b16 %v866
        %v1024 = vunpack.c.l.b16 %v867
        %v1025 = vunpack.c.h.b16 %v867
        %v1026 = vunpack.c.l.b16 %v868
        %v1027 = vunpack.c.h.b16 %v868
        %v1028 = vunpack.c.l.b16 %v869
        %v1029 = vunpack.c.h.b16 %v869
        %v1030 = vunpack.c.l.b16 %v870
        %v1031 = vunpack.c.h.b16 %v870
        %v1032 = vunpack.c.l.b16 %v871
        %v1033 = vunpack.c.h.b16 %v871
        %v1034 = vunpack.c.l.b16 %v872
        %v1035 = vunpack.c.h.b16 %v872
        %v1036 = vunpack.c.l.b16 %v873
        %v1037 = vunpack.c.h.b16 %v873
        %v1038 = vunpack.c.l.b16 %v874
        %v1039 = vunpack.c.h.b16 %v874
        %v1040 = vunpack.c.l.b16 %v875
        %v1041 = vunpack.c.h.b16 %v875
        %v1042 = vunpack.c.l.b16 %v876
        %v1043 = vunpack.c.h.b16 %v876
        %v1044 = vunpack.c.l.b16 %v877
        %v1045 = vunpack.c.h.b16 %v877
        %v1046 = vunpack.c.l.b16 %v878
        %v1047 = vunpack.c.h.b16 %v878
        %v1048 = vunpack.c.l.b16 %v879
        %v1049 = vunpack.c.h.b16 %v879
        %v1050 = vunpack.c.l.b16 %v880
        %v1051 = vunpack.c.h.b16 %v880
        %v1052 = vunpack.c.l.b16 %v881
        %v1053 = vunpack.c.h.b16 %v881
        %v1054 = vunpack.c.l.b16 %v882
        %v1055 = vunpack.c.h.b16 %v882
        %v1056 = vunpack.c.l.b16 %v883
        %v1057 = vunpack.c.h.b16 %v883
        %v1058 = vunpack.c.l.b16 %v884
        %v1059 = vunpack.c.h.b16 %v884
        %v1060 = vunpack.c.l.b16 %v885
        %v1061 = vunpack.c.h.b16 %v885
        %v1062 = vunpack.c.l.b16 %v886
        %v1063 = vunpack.c.h.b16 %v886
        %v1064 = vunpack.c.l.b16 %v887
        %v1065 = vunpack.c.h.b16 %v887
        %v1066 = vunpack.c.l.b16 %v888
        %v1067 = vunpack.c.h.b16 %v888
        %v1068 = vunpack.c.l.b16 %v889
        %v1069 = vunpack.c.h.b16 %v889
        %v1070 = vunpack.c.l.b16 %v890
        %v1071 = vunpack.c.h.b16 %v890
        %v1072 = vunpack.c.l.b16 %v891
        %v1073 = vunpack.c.h.b16 %v891
        %v1074 = vunpack.c.l.b16 %v892
        %v1075 = vunpack.c.h.b16 %v892
        %v1076 = vunpack.c.l.b16 %v893
        %v1077 = vunpack.c.h.b16 %v893
        %v1078 = vunpack.c.l.b16 %v894
        %v1079 = vunpack.c.h.b16 %v894
        %v1080 = vunpack.c.l.b16 %v895
        %v1081 = vunpack.c.h.b16 %v895
        %v1082 = vunpack.c.l.b16 %v896
        %v1083 = vunpack.c.h.b16 %v896
        %v1084 = vunpack.c.l.b16 %v897
        %v1085 = vunpack.c.h.b16 %v897
        %v1086 = vunpack.c.l.b16 %v898
        %v1087 = vunpack.c.h.b16 %v898
        %v1088 = vunpack.c.l.b16 %v899
        %v1089 = vunpack.c.h.b16 %v899
        %v1090 = vunpack.c.l.b16 %v900
        %v1091 = vunpack.c.h.b16 %v900
        %v1092 = vunpack.c.l.b16 %v901
        %v1093 = vunpack.c.h.b16 %v901
        %v1094 = vpack.c.b16 %v968, %v966
        %v1095 = vpack.c.b16 %v969, %v967
        %v1096 = vpack.c.b16 %v972, %v970
        %v1097 = vpack.c.b16 %v973, %v971
        %v1098 = vpack.c.b16 %v976, %v974
        %v1099 = vpack.c.b16 %v977, %v975
        %v1100 = vpack.c.b16 %v980, %v978
        %v1101 = vpack.c.b16 %v981, %v979
        %v1102 = vpack.c.b16 %v984, %v982
        %v1103 = vpack.c.b16 %v985, %v983
        %v1104 = vpack.c.b16 %v988, %v986
        %v1105 = vpack.c.b16 %v989, %v987
        %v1106 = vpack.c.b16 %v992, %v990
        %v1107 = vpack.c.b16 %v993, %v991
        %v1108 = vpack.c.b16 %v996, %v994
        %v1109 = vpack.c.b16 %v997, %v995
        %v1110 = vpack.c.b16 %v1000, %v998
        %v1111 = vpack.c.b16 %v1001, %v999
        %v1112 = vpack.c.b16 %v1004, %v1002
        %v1113 = vpack.c.b16 %v1005, %v1003
        %v1114 = vpack.c.b16 %v1008, %v1006
        %v1115 = vpack.c.b16 %v1009, %v1007
        %v1116 = vpack.c.b16 %v1012, %v1010
        %v1117 = vpack.c.b16 %v1013, %v1011
        %v1118 = vpack.c.b16 %v1016, %v1014
        %v1119 = vpack.c.b16 %v1017, %v1015
        %v1120 = vpack.c.b16 %v1020, %v1018
        %v1121 = vpack.c.b16 %v1021, %v1019
        %v1122 = vpack.c.b16 %v1024, %v1022
        %v1123 = vpack.c.b16 %v1025, %v1023
        %v1124 = vpack.c.b16 %v1028, %v1026
        %v1125 = vpack.c.b16 %v1029, %v1027
        %v1126 = vpack.c.b16 %v1032, %v1030
        %v1127 = vpack.c.b16 %v1033, %v1031
        %v1128 = vpack.c.b16 %v1036, %v1034
        %v1129 = vpack.c.b16 %v1037, %v1035
        %v1130 = vpack.c.b16 %v1040, %v1038
        %v1131 = vpack.c.b16 %v1041, %v1039
        %v1132 = vpack.c.b16 %v1044, %v1042
        %v1133 = vpack.c.b16 %v1045, %v1043
        %v1134 = vpack.c.b16 %v1048, %v1046
        %v1135 = vpack.c.b16 %v1049, %v1047
        %v1136 = vpack.c.b16 %v1052, %v1050
        %v1137 = vpack.c.b16 %v1053, %v1051
        %v1138 = vpack.c.b16 %v1056, %v1054
        %v1139 = vpack.c.b16 %v1057, %v1055
        %v1140 = vpack.c.b16 %v1060, %v1058
        %v1141 = vpack.c.b16 %v1061, %v1059
        %v1142 = vpack.c.b16 %v1064, %v1062
        %v1143 = vpack.c.b16 %v1065, %v1063
        %v1144 = vpack.c.b16 %v1068, %v1066
        %v1145 = vpack.c.b16 %v1069, %v1067
        %v1146 = vpack.c.b16 %v1072, %v1070
        %v1147 = vpack.c.b16 %v1073, %v1071
        %v1148 = vpack.c.b16 %v1076, %v1074
        %v1149 = vpack.c.b16 %v1077, %v1075
        %v1150 = vpack.c.b16 %v1080, %v1078
        %v1151 = vpack.c.b16 %v1081, %v1079
        %v1152 = vpack.c.b16 %v1084, %v1082
        %v1153 = vpack.c.b16 %v1085, %v1083
        %v1154 = vpack.c.b16 %v1088, %v1086
        %v1155 = vpack.c.b16 %v1089, %v1087
        %v1156 = vpack.c.b16 %v1092, %v1090
        %v1157 = vpack.c.b16 %v1093, %v1091
        %1222 = vmatprep.subr.bf16.mxu0 %v1095
        %1223 = vmatpush1.bf16.msra.mxu0 %v1094
        %1224 = vmatprep.subr.bf16.mxu0 %v1097
        %1225 = vmatpush1.bf16.msra.mxu0 %v1096
        %1226 = vmatprep.subr.bf16.mxu0 %v1099
        %1227 = vmatpush1.bf16.msra.mxu0 %v1098
        %1228 = vmatprep.subr.bf16.mxu0 %v1101
        %1229 = vmatpush1.bf16.msra.mxu0 %v1100
        %1230 = vmatprep.subr.bf16.mxu0 %v1103
        %1231 = vmatpush1.bf16.msra.mxu0 %v1102
        %1232 = vmatprep.subr.bf16.mxu0 %v1105
        %1233 = vmatpush1.bf16.msra.mxu0 %v1104
        %1234 = vmatprep.subr.bf16.mxu0 %v1107
        %1235 = vmatpush1.bf16.msra.mxu0 %v1106
        %1236 = vmatprep.subr.bf16.mxu0 %v1109
        %1237 = vmatpush1.bf16.msra.mxu0 %v1108
        %1238 = vmatprep.subr.bf16.mxu0 %v1111
        %1239 = vmatpush1.bf16.msra.mxu0 %v1110
        %1240 = vmatprep.subr.bf16.mxu0 %v1113
        %1241 = vmatpush1.bf16.msra.mxu0 %v1112
        %1242 = vmatprep.subr.bf16.mxu0 %v1115
        %1243 = vmatpush1.bf16.msra.mxu0 %v1114
        %1244 = vmatprep.subr.bf16.mxu0 %v1117
        %1245 = vmatpush1.bf16.msra.mxu0 %v1116
        %1246 = vmatprep.subr.bf16.mxu0 %v1119
        %1247 = vmatpush1.bf16.msra.mxu0 %v1118
        %1248 = vmatprep.subr.bf16.mxu0 %v1121
        %1249 = vmatpush1.bf16.msra.mxu0 %v1120
        %1250 = vmatprep.subr.bf16.mxu0 %v1123
        %1251 = vmatpush1.bf16.msra.mxu0 %v1122
        %1252 = vmatprep.subr.bf16.mxu0 %v1125
        %1253 = vmatpush1.bf16.msra.mxu0 %v1124
        %1254 = vmatprep.mubr.bf16.mxu0 %v831
        %1255 = vmatmul.mubr.bf16.gmra.mrb[0].mxu0 %v830
        %v1256 = vpop.f32.mrb[0].mxu0
        %v1257 = vadd.f32 0.0, %v1256
        %v1258 = vpop.f32.mrb[0].mxu0
        %v1259 = vadd.f32 0.0, %v1258
        %v1260 = vpop.f32.mrb[0].mxu0
        %v1261 = vadd.f32 0.0, %v1260
        %v1262 = vpop.f32.mrb[0].mxu0
        %v1263 = vadd.f32 0.0, %v1262
        %1264 = vmatprep.mubr.bf16.mxu0 %v835
        %1265 = vmatmul.mubr.bf16.gmra.mrb[0].mxu0 %v834
        %v1266 = vpop.f32.mrb[0].mxu0
        %v1267 = vadd.f32 0.0, %v1266
        %v1268 = vpop.f32.mrb[0].mxu0
        %v1269 = vadd.f32 0.0, %v1268
        %v1270 = vpop.f32.mrb[0].mxu0
        %v1271 = vadd.f32 0.0, %v1270
        %v1272 = vpop.f32.mrb[0].mxu0
        %v1273 = vadd.f32 0.0, %v1272
        %1274 = vdwg.mxu0
        %1275 = vmatprep.subr.bf16.mxu0 %v1127
        %1276 = vmatpush1.bf16.msra.mxu0 %v1126
        %1277 = vmatprep.subr.bf16.mxu0 %v1129
        %1278 = vmatpush1.bf16.msra.mxu0 %v1128
        %1279 = vmatprep.subr.bf16.mxu0 %v1131
        %1280 = vmatpush1.bf16.msra.mxu0 %v1130
        %1281 = vmatprep.subr.bf16.mxu0 %v1133
        %1282 = vmatpush1.bf16.msra.mxu0 %v1132
        %1283 = vmatprep.subr.bf16.mxu0 %v1135
        %1284 = vmatpush1.bf16.msra.mxu0 %v1134
        %1285 = vmatprep.subr.bf16.mxu0 %v1137
        %1286 = vmatpush1.bf16.msra.mxu0 %v1136
        %1287 = vmatprep.subr.bf16.mxu0 %v1139
        %1288 = vmatpush1.bf16.msra.mxu0 %v1138
        %1289 = vmatprep.subr.bf16.mxu0 %v1141
        %1290 = vmatpush1.bf16.msra.mxu0 %v1140
        %1291 = vmatprep.subr.bf16.mxu0 %v1143
        %1292 = vmatpush1.bf16.msra.mxu0 %v1142
        %1293 = vmatprep.subr.bf16.mxu0 %v1145
        %1294 = vmatpush1.bf16.msra.mxu0 %v1144
        %1295 = vmatprep.subr.bf16.mxu0 %v1147
        %1296 = vmatpush1.bf16.msra.mxu0 %v1146
        %1297 = vmatprep.subr.bf16.mxu0 %v1149
        %1298 = vmatpush1.bf16.msra.mxu0 %v1148
        %1299 = vmatprep.subr.bf16.mxu0 %v1151
        %1300 = vmatpush1.bf16.msra.mxu0 %v1150
        %1301 = vmatprep.subr.bf16.mxu0 %v1153
        %1302 = vmatpush1.bf16.msra.mxu0 %v1152
        %1303 = vmatprep.subr.bf16.mxu0 %v1155
        %1304 = vmatpush1.bf16.msra.mxu0 %v1154
        %1305 = vmatprep.subr.bf16.mxu0 %v1157
        %1306 = vmatpush1.bf16.msra.mxu0 %v1156
        %1307 = vmatprep.mubr.bf16.mxu0 %v833
        %1308 = vmatmul.mubr.bf16.gmra.mrb[0].mxu0 %v832
        %v1309 = vpop.f32.mrb[0].mxu0
        %v1310 = vadd.f32 %v1257, %v1309
        %v1311 = vpop.f32.mrb[0].mxu0
        %v1312 = vadd.f32 %v1259, %v1311
        %v1313 = vpop.f32.mrb[0].mxu0
        %v1314 = vadd.f32 %v1261, %v1313
        %v1315 = vpop.f32.mrb[0].mxu0
        %v1316 = vadd.f32 %v1263, %v1315
        %1317 = vmatprep.mubr.bf16.mxu0 %v837
        %1318 = vmatmul.mubr.bf16.gmra.mrb[0].mxu0 %v836
        %v1319 = vpop.f32.mrb[0].mxu0
        %v1320 = vadd.f32 %v1267, %v1319
        %v1321 = vpop.f32.mrb[0].mxu0
        %v1322 = vadd.f32 %v1269, %v1321
        %v1323 = vpop.f32.mrb[0].mxu0
        %v1324 = vadd.f32 %v1271, %v1323
        %v1325 = vpop.f32.mrb[0].mxu0
        %v1326 = vadd.f32 %v1273, %v1325
        %1327 = vdwg.mxu0
        %v1328 = vxor.u32 %v1310, 2147483648
        %v1329 = vxor.u32 %v1312, 2147483648
        %v1330 = vxor.u32 %v1314, 2147483648
        %v1331 = vxor.u32 %v1316, 2147483648
        %v1332 = vxor.u32 %v1320, 2147483648
        %v1333 = vxor.u32 %v1322, 2147483648
        %v1334 = vxor.u32 %v1324, 2147483648
        %v1335 = vxor.u32 %v1326, 2147483648
        %v1336 = vmul.f32 %v1328, 1.442695
        %v1337 = vpow.pop %v1336
        %v1338 = vmul.f32 %v1329, 1.442695
        %v1339 = vpow.pop %v1338
        %v1340 = vmul.f32 %v1330, 1.442695
        %v1341 = vpow.pop %v1340
        %v1342 = vmul.f32 %v1331, 1.442695
        %v1343 = vpow.pop %v1342
        %v1344 = vmul.f32 %v1332, 1.442695
        %v1345 = vpow.pop %v1344
        %v1346 = vmul.f32 %v1333, 1.442695
        %v1347 = vpow.pop %v1346
        %v1348 = vmul.f32 %v1334, 1.442695
        %v1349 = vpow.pop %v1348
        %v1350 = vmul.f32 %v1335, 1.442695
        %v1351 = vpow.pop %v1350
        %v1352 = vadd.f32 %v1337, 1.0
        %v1353 = vadd.f32 %v1339, 1.0
        %v1354 = vadd.f32 %v1341, 1.0
        %v1355 = vadd.f32 %v1343, 1.0
        %v1356 = vadd.f32 %v1345, 1.0
        %v1357 = vadd.f32 %v1347, 1.0
        %v1358 = vadd.f32 %v1349, 1.0
        %v1359 = vadd.f32 %v1351, 1.0
        %v1360 = vrcp.pop %v1352
        %v1361 = vmul.f32 1.0, %v1360
        %v1362 = vrcp.pop %v1353
        %v1363 = vmul.f32 1.0, %v1362
        %v1364 = vrcp.pop %v1354
        %v1365 = vmul.f32 1.0, %v1364
        %v1366 = vrcp.pop %v1355
        %v1367 = vmul.f32 1.0, %v1366
        %v1368 = vrcp.pop %v1356
        %v1369 = vmul.f32 1.0, %v1368
        %v1370 = vrcp.pop %v1357
        %v1371 = vmul.f32 1.0, %v1370
        %v1372 = vrcp.pop %v1358
        %v1373 = vmul.f32 1.0, %v1372
        %v1374 = vrcp.pop %v1359
        %v1375 = vmul.f32 1.0, %v1374
        %v1376 = vmul.f32 %v1361, 1.442695
        %v1377 = vpow.pop %v1376
        %v1378 = vmul.f32 %v1363, 1.442695
        %v1379 = vpow.pop %v1378
        %v1380 = vmul.f32 %v1365, 1.442695
        %v1381 = vpow.pop %v1380
        %v1382 = vmul.f32 %v1367, 1.442695
        %v1383 = vpow.pop %v1382
        %v1384 = vmul.f32 %v1369, 1.442695
        %v1385 = vpow.pop %v1384
        %v1386 = vmul.f32 %v1371, 1.442695
        %v1387 = vpow.pop %v1386
        %v1388 = vmul.f32 %v1373, 1.442695
        %v1389 = vpow.pop %v1388
        %v1390 = vmul.f32 %v1375, 1.442695
        %v1391 = vpow.pop %v1390
        %v1396 = vunpack.c.l.b16 %v281
        %v1397 = vunpack.c.h.b16 %v281
        %v1398 = vunpack.c.l.b16 %v283
        %v1399 = vunpack.c.h.b16 %v283
        %v1400 = vunpack.c.l.b16 %v285
        %v1401 = vunpack.c.h.b16 %v285
        %v1402 = vunpack.c.l.b16 %v287
        %v1403 = vunpack.c.h.b16 %v287
        %v1404 = vpack.c.b16 %v1398, %v1396
        %v1405 = vpack.c.b16 %v1399, %v1397
        %v1406 = vpack.c.b16 %v1402, %v1400
        %v1407 = vpack.c.b16 %v1403, %v1401
        %1412 = vmatprep.subr.bf16.mxu0 %v581
        %1413 = vmatpush1.bf16.msra.mxu0 %v580
        %1414 = vmatprep.subr.bf16.mxu0 %v585
        %1415 = vmatpush1.bf16.msra.mxu0 %v584
        %1416 = vmatprep.subr.bf16.mxu0 %v589
        %1417 = vmatpush1.bf16.msra.mxu0 %v588
        %1418 = vmatprep.subr.bf16.mxu0 %v593
        %1419 = vmatpush1.bf16.msra.mxu0 %v592
        %1420 = vmatprep.subr.bf16.mxu0 %v597
        %1421 = vmatpush1.bf16.msra.mxu0 %v596
        %1422 = vmatprep.subr.bf16.mxu0 %v601
        %1423 = vmatpush1.bf16.msra.mxu0 %v600
        %1424 = vmatprep.subr.bf16.mxu0 %v605
        %1425 = vmatpush1.bf16.msra.mxu0 %v604
        %1426 = vmatprep.subr.bf16.mxu0 %v609
        %1427 = vmatpush1.bf16.msra.mxu0 %v608
        %1428 = vmatprep.subr.bf16.mxu0 %v613
        %1429 = vmatpush1.bf16.msra.mxu0 %v612
        %1430 = vmatprep.subr.bf16.mxu0 %v617
        %1431 = vmatpush1.bf16.msra.mxu0 %v616
        %1432 = vmatprep.subr.bf16.mxu0 %v621
        %1433 = vmatpush1.bf16.msra.mxu0 %v620
        %1434 = vmatprep.subr.bf16.mxu0 %v625
        %1435 = vmatpush1.bf16.msra.mxu0 %v624
        %1436 = vmatprep.subr.bf16.mxu0 %v629
        %1437 = vmatpush1.bf16.msra.mxu0 %v628
        %1438 = vmatprep.subr.bf16.mxu0 %v633
        %1439 = vmatpush1.bf16.msra.mxu0 %v632
        %1440 = vmatprep.subr.bf16.mxu0 %v637
        %1441 = vmatpush1.bf16.msra.mxu0 %v636
        %1442 = vmatprep.subr.bf16.mxu0 %v641
        %1443 = vmatpush1.bf16.msra.mxu0 %v640
        %1444 = vmatprep.mubr.bf16.mxu0 %v1405
        %1445 = vmatmul.mubr.bf16.gmra.mrb[0].mxu0 %v1404
        %v1446 = vpop.f32.mrb[0].mxu0
        %v1447 = vadd.f32 0.0, %v1446
        %v1448 = vpop.f32.mrb[0].mxu0
        %v1449 = vadd.f32 0.0, %v1448
        %v1450 = vpop.f32.mrb[0].mxu0
        %v1451 = vadd.f32 0.0, %v1450
        %v1452 = vpop.f32.mrb[0].mxu0
        %v1453 = vadd.f32 0.0, %v1452
        %1454 = vmatprep.mubr.bf16.mxu0 %v1407
        %1455 = vmatmul.mubr.bf16.gmra.mrb[0].mxu0 %v1406
        %v1456 = vpop.f32.mrb[0].mxu0
        %v1457 = vadd.f32 0.0, %v1456
        %v1458 = vpop.f32.mrb[0].mxu0
        %v1459 = vadd.f32 0.0, %v1458
        %v1460 = vpop.f32.mrb[0].mxu0
        %v1461 = vadd.f32 0.0, %v1460
        %v1462 = vpop.f32.mrb[0].mxu0
        %v1463 = vadd.f32 0.0, %v1462
        %1464 = vdwg.mxu0
        %1465 = vmatprep.subr.bf16.mxu0 %v583
        %1466 = vmatpush1.bf16.msra.mxu0 %v582
        %1467 = vmatprep.subr.bf16.mxu0 %v587
        %1468 = vmatpush1.bf16.msra.mxu0 %v586
        %1469 = vmatprep.subr.bf16.mxu0 %v591
        %1470 = vmatpush1.bf16.msra.mxu0 %v590
        %1471 = vmatprep.subr.bf16.mxu0 %v595
        %1472 = vmatpush1.bf16.msra.mxu0 %v594
        %1473 = vmatprep.subr.bf16.mxu0 %v599
        %1474 = vmatpush1.bf16.msra.mxu0 %v598
        %1475 = vmatprep.subr.bf16.mxu0 %v603
        %1476 = vmatpush1.bf16.msra.mxu0 %v602
        %1477 = vmatprep.subr.bf16.mxu0 %v607
        %1478 = vmatpush1.bf16.msra.mxu0 %v606
        %1479 = vmatprep.subr.bf16.mxu0 %v611
        %1480 = vmatpush1.bf16.msra.mxu0 %v610
        %1481 = vmatprep.subr.bf16.mxu0 %v615
        %1482 = vmatpush1.bf16.msra.mxu0 %v614
        %1483 = vmatprep.subr.bf16.mxu0 %v619
        %1484 = vmatpush1.bf16.msra.mxu0 %v618
        %1485 = vmatprep.subr.bf16.mxu0 %v623
        %1486 = vmatpush1.bf16.msra.mxu0 %v622
        %1487 = vmatprep.subr.bf16.mxu0 %v627
        %1488 = vmatpush1.bf16.msra.mxu0 %v626
        %1489 = vmatprep.subr.bf16.mxu0 %v631
        %1490 = vmatpush1.bf16.msra.mxu0 %v630
        %1491 = vmatprep.subr.bf16.mxu0 %v635
        %1492 = vmatpush1.bf16.msra.mxu0 %v634
        %1493 = vmatprep.subr.bf16.mxu0 %v639
        %1494 = vmatpush1.bf16.msra.mxu0 %v638
        %1495 = vmatprep.subr.bf16.mxu0 %v643
        %1496 = vmatpush1.bf16.msra.mxu0 %v642
        %1497 = vmatprep.mubr.bf16.mxu0 %v1405
        %1498 = vmatmul.mubr.bf16.gmra.mrb[0].mxu0 %v1404
        %v1499 = vpop.f32.mrb[0].mxu0
        %v1500 = vadd.f32 0.0, %v1499
        %v1501 = vpop.f32.mrb[0].mxu0
        %v1502 = vadd.f32 0.0, %v1501
        %v1503 = vpop.f32.mrb[0].mxu0
        %v1504 = vadd.f32 0.0, %v1503
        %v1505 = vpop.f32.mrb[0].mxu0
        %v1506 = vadd.f32 0.0, %v1505
        %1507 = vmatprep.mubr.bf16.mxu0 %v1407
        %1508 = vmatmul.mubr.bf16.gmra.mrb[0].mxu0 %v1406
        %v1509 = vpop.f32.mrb[0].mxu0
        %v1510 = vadd.f32 0.0, %v1509
        %v1511 = vpop.f32.mrb[0].mxu0
        %v1512 = vadd.f32 0.0, %v1511
        %v1513 = vpop.f32.mrb[0].mxu0
        %v1514 = vadd.f32 0.0, %v1513
        %v1515 = vpop.f32.mrb[0].mxu0
        %v1516 = vadd.f32 0.0, %v1515
        %1517 = vdwg.mxu0
        %v1518 = vmax.f32 %v1447, 0.0
        %v1519 = vmax.f32 %v1449, 0.0
        %v1520 = vmax.f32 %v1500, 0.0
        %v1521 = vmax.f32 %v1502, 0.0
        %v1522 = vmax.f32 %v1451, 0.0
        %v1523 = vmax.f32 %v1453, 0.0
        %v1524 = vmax.f32 %v1504, 0.0
        %v1525 = vmax.f32 %v1506, 0.0
        %v1526 = vmax.f32 %v1457, 0.0
        %v1527 = vmax.f32 %v1459, 0.0
        %v1528 = vmax.f32 %v1510, 0.0
        %v1529 = vmax.f32 %v1512, 0.0
        %v1530 = vmax.f32 %v1461, 0.0
        %v1531 = vmax.f32 %v1463, 0.0
        %v1532 = vmax.f32 %v1514, 0.0
        %v1533 = vmax.f32 %v1516, 0.0
        %v1534 = vpack.c.bf16 %v1522, %v1518
        %v1535 = vpack.c.bf16 %v1523, %v1519
        %v1536 = vpack.c.bf16 %v1524, %v1520
        %v1537 = vpack.c.bf16 %v1525, %v1521
        %v1538 = vpack.c.bf16 %v1530, %v1526
        %v1539 = vpack.c.bf16 %v1531, %v1527
        %v1540 = vpack.c.bf16 %v1532, %v1528
        %v1541 = vpack.c.bf16 %v1533, %v1529
        %1542 = vmatprep.subr.bf16.mxu0 %v1095
        %1543 = vmatpush1.bf16.msra.mxu0 %v1094
        %1544 = vmatprep.subr.bf16.mxu0 %v1097
        %1545 = vmatpush1.bf16.msra.mxu0 %v1096
        %1546 = vmatprep.subr.bf16.mxu0 %v1099
        %1547 = vmatpush1.bf16.msra.mxu0 %v1098
        %1548 = vmatprep.subr.bf16.mxu0 %v1101
        %1549 = vmatpush1.bf16.msra.mxu0 %v1100
        %1550 = vmatprep.subr.bf16.mxu0 %v1103
        %1551 = vmatpush1.bf16.msra.mxu0 %v1102
        %1552 = vmatprep.subr.bf16.mxu0 %v1105
        %1553 = vmatpush1.bf16.msra.mxu0 %v1104
        %1554 = vmatprep.subr.bf16.mxu0 %v1107
        %1555 = vmatpush1.bf16.msra.mxu0 %v1106
        %1556 = vmatprep.subr.bf16.mxu0 %v1109
        %1557 = vmatpush1.bf16.msra.mxu0 %v1108
        %1558 = vmatprep.subr.bf16.mxu0 %v1111
        %1559 = vmatpush1.bf16.msra.mxu0 %v1110
        %1560 = vmatprep.subr.bf16.mxu0 %v1113
        %1561 = vmatpush1.bf16.msra.mxu0 %v1112
        %1562 = vmatprep.subr.bf16.mxu0 %v1115
        %1563 = vmatpush1.bf16.msra.mxu0 %v1114
        %1564 = vmatprep.subr.bf16.mxu0 %v1117
        %1565 = vmatpush1.bf16.msra.mxu0 %v1116
        %1566 = vmatprep.subr.bf16.mxu0 %v1119
        %1567 = vmatpush1.bf16.msra.mxu0 %v1118
        %1568 = vmatprep.subr.bf16.mxu0 %v1121
        %1569 = vmatpush1.bf16.msra.mxu0 %v1120
        %1570 = vmatprep.subr.bf16.mxu0 %v1123
        %1571 = vmatpush1.bf16.msra.mxu0 %v1122
        %1572 = vmatprep.subr.bf16.mxu0 %v1125
        %1573 = vmatpush1.bf16.msra.mxu0 %v1124
        %1574 = vmatprep.mubr.bf16.mxu0 %v1535
        %1575 = vmatmul.mubr.bf16.gmra.mrb[0].mxu0 %v1534
        %v1576 = vpop.f32.mrb[0].mxu0
        %v1577 = vadd.f32 0.0, %v1576
        %v1578 = vpop.f32.mrb[0].mxu0
        %v1579 = vadd.f32 0.0, %v1578
        %v1580 = vpop.f32.mrb[0].mxu0
        %v1581 = vadd.f32 0.0, %v1580
        %v1582 = vpop.f32.mrb[0].mxu0
        %v1583 = vadd.f32 0.0, %v1582
        %1584 = vmatprep.mubr.bf16.mxu0 %v1539
        %1585 = vmatmul.mubr.bf16.gmra.mrb[0].mxu0 %v1538
        %v1586 = vpop.f32.mrb[0].mxu0
        %v1587 = vadd.f32 0.0, %v1586
        %v1588 = vpop.f32.mrb[0].mxu0
        %v1589 = vadd.f32 0.0, %v1588
        %v1590 = vpop.f32.mrb[0].mxu0
        %v1591 = vadd.f32 0.0, %v1590
        %v1592 = vpop.f32.mrb[0].mxu0
        %v1593 = vadd.f32 0.0, %v1592
        %1594 = vdwg.mxu0
        %1595 = vmatprep.subr.bf16.mxu0 %v1127
        %1596 = vmatpush1.bf16.msra.mxu0 %v1126
        %1597 = vmatprep.subr.bf16.mxu0 %v1129
        %1598 = vmatpush1.bf16.msra.mxu0 %v1128
        %1599 = vmatprep.subr.bf16.mxu0 %v1131
        %1600 = vmatpush1.bf16.msra.mxu0 %v1130
        %1601 = vmatprep.subr.bf16.mxu0 %v1133
        %1602 = vmatpush1.bf16.msra.mxu0 %v1132
        %1603 = vmatprep.subr.bf16.mxu0 %v1135
        %1604 = vmatpush1.bf16.msra.mxu0 %v1134
        %1605 = vmatprep.subr.bf16.mxu0 %v1137
        %1606 = vmatpush1.bf16.msra.mxu0 %v1136
        %1607 = vmatprep.subr.bf16.mxu0 %v1139
        %1608 = vmatpush1.bf16.msra.mxu0 %v1138
        %1609 = vmatprep.subr.bf16.mxu0 %v1141
        %1610 = vmatpush1.bf16.msra.mxu0 %v1140
        %1611 = vmatprep.subr.bf16.mxu0 %v1143
        %1612 = vmatpush1.bf16.msra.mxu0 %v1142
        %1613 = vmatprep.subr.bf16.mxu0 %v1145
        %1614 = vmatpush1.bf16.msra.mxu0 %v1144
        %1615 = vmatprep.subr.bf16.mxu0 %v1147
        %1616 = vmatpush1.bf16.msra.mxu0 %v1146
        %1617 = vmatprep.subr.bf16.mxu0 %v1149
        %1618 = vmatpush1.bf16.msra.mxu0 %v1148
        %1619 = vmatprep.subr.bf16.mxu0 %v1151
        %1620 = vmatpush1.bf16.msra.mxu0 %v1150
        %1621 = vmatprep.subr.bf16.mxu0 %v1153
        %1622 = vmatpush1.bf16.msra.mxu0 %v1152
        %1623 = vmatprep.subr.bf16.mxu0 %v1155
        %1624 = vmatpush1.bf16.msra.mxu0 %v1154
        %1625 = vmatprep.subr.bf16.mxu0 %v1157
        %1626 = vmatpush1.bf16.msra.mxu0 %v1156
        %1627 = vmatprep.mubr.bf16.mxu0 %v1537
        %1628 = vmatmul.mubr.bf16.gmra.mrb[0].mxu0 %v1536
        %v1629 = vpop.f32.mrb[0].mxu0
        %v1630 = vadd.f32 %v1577, %v1629
        %v1631 = vpop.f32.mrb[0].mxu0
        %v1632 = vadd.f32 %v1579, %v1631
        %v1633 = vpop.f32.mrb[0].mxu0
        %v1634 = vadd.f32 %v1581, %v1633
        %v1635 = vpop.f32.mrb[0].mxu0
        %v1636 = vadd.f32 %v1583, %v1635
        %1637 = vmatprep.mubr.bf16.mxu0 %v1541
        %1638 = vmatmul.mubr.bf16.gmra.mrb[0].mxu0 %v1540
        %v1639 = vpop.f32.mrb[0].mxu0
        %v1640 = vadd.f32 %v1587, %v1639
        %v1641 = vpop.f32.mrb[0].mxu0
        %v1642 = vadd.f32 %v1589, %v1641
        %v1643 = vpop.f32.mrb[0].mxu0
        %v1644 = vadd.f32 %v1591, %v1643
        %v1645 = vpop.f32.mrb[0].mxu0
        %v1646 = vadd.f32 %v1593, %v1645
        %1647 = vdwg.mxu0
        %v1648 = vxor.u32 %v1630, 2147483648
        %v1649 = vxor.u32 %v1632, 2147483648
        %v1650 = vxor.u32 %v1634, 2147483648
        %v1651 = vxor.u32 %v1636, 2147483648
        %v1652 = vxor.u32 %v1640, 2147483648
        %v1653 = vxor.u32 %v1642, 2147483648
        %v1654 = vxor.u32 %v1644, 2147483648
        %v1655 = vxor.u32 %v1646, 2147483648
        %v1656 = vmul.f32 %v1648, 1.442695
        %v1657 = vpow.pop %v1656
        %v1658 = vmul.f32 %v1649, 1.442695
        %v1659 = vpow.pop %v1658
        %v1660 = vmul.f32 %v1650, 1.442695
        %v1661 = vpow.pop %v1660
        %v1662 = vmul.f32 %v1651, 1.442695
        %v1663 = vpow.pop %v1662
        %v1664 = vmul.f32 %v1652, 1.442695
        %v1665 = vpow.pop %v1664
        %v1666 = vmul.f32 %v1653, 1.442695
        %v1667 = vpow.pop %v1666
        %v1668 = vmul.f32 %v1654, 1.442695
        %v1669 = vpow.pop %v1668
        %v1670 = vmul.f32 %v1655, 1.442695
        %v1671 = vpow.pop %v1670
        %v1672 = vadd.f32 %v1657, 1.0
        %v1673 = vadd.f32 %v1659, 1.0
        %v1674 = vadd.f32 %v1661, 1.0
        %v1675 = vadd.f32 %v1663, 1.0
        %v1676 = vadd.f32 %v1665, 1.0
        %v1677 = vadd.f32 %v1667, 1.0
        %v1678 = vadd.f32 %v1669, 1.0
        %v1679 = vadd.f32 %v1671, 1.0
        %v1680 = vrcp.pop %v1672
        %v1681 = vmul.f32 1.0, %v1680
        %v1682 = vrcp.pop %v1673
        %v1683 = vmul.f32 1.0, %v1682
        %v1684 = vrcp.pop %v1674
        %v1685 = vmul.f32 1.0, %v1684
        %v1686 = vrcp.pop %v1675
        %v1687 = vmul.f32 1.0, %v1686
        %v1688 = vrcp.pop %v1676
        %v1689 = vmul.f32 1.0, %v1688
        %v1690 = vrcp.pop %v1677
        %v1691 = vmul.f32 1.0, %v1690
        %v1692 = vrcp.pop %v1678
        %v1693 = vmul.f32 1.0, %v1692
        %v1694 = vrcp.pop %v1679
        %v1695 = vmul.f32 1.0, %v1694
        %v1696 = vmul.f32 %v1681, 1.442695
        %v1697 = vpow.pop %v1696
        %v1698 = vmul.f32 %v1683, 1.442695
        %v1699 = vpow.pop %v1698
        %v1700 = vmul.f32 %v1685, 1.442695
        %v1701 = vpow.pop %v1700
        %v1702 = vmul.f32 %v1687, 1.442695
        %v1703 = vpow.pop %v1702
        %v1704 = vmul.f32 %v1689, 1.442695
        %v1705 = vpow.pop %v1704
        %v1706 = vmul.f32 %v1691, 1.442695
        %v1707 = vpow.pop %v1706
        %v1708 = vmul.f32 %v1693, 1.442695
        %v1709 = vpow.pop %v1708
        %v1710 = vmul.f32 %v1695, 1.442695
        %v1711 = vpow.pop %v1710
        %v1712 = vmul.f32 %v288, %v1377
        %v1713 = vmul.f32 %v289, %v1379
        %v1714 = vmul.f32 %v290, %v1697
        %v1715 = vmul.f32 %v291, %v1699
        %v1716 = vmul.f32 %v292, %v1381
        %v1717 = vmul.f32 %v293, %v1383
        %v1718 = vmul.f32 %v294, %v1701
        %v1719 = vmul.f32 %v295, %v1703
        %v1720 = vmul.f32 %v296, %v1385
        %v1721 = vmul.f32 %v297, %v1387
        %v1722 = vmul.f32 %v298, %v1705
        %v1723 = vmul.f32 %v299, %v1707
        %v1724 = vmul.f32 %v300, %v1389
        %v1725 = vmul.f32 %v301, %v1391
        %v1726 = vmul.f32 %v302, %v1709
        %v1727 = vmul.f32 %v303, %v1711
        %v1728 = vpack.c.bf16 %v1716, %v1712
        %v1729 = vpack.c.bf16 %v1717, %v1713
        %v1730 = vpack.c.bf16 %v1718, %v1714
        %v1731 = vpack.c.bf16 %v1719, %v1715
        %v1732 = vpack.c.bf16 %v1724, %v1720
        %v1733 = vpack.c.bf16 %v1725, %v1721
        %v1734 = vpack.c.bf16 %v1726, %v1722
        %v1735 = vpack.c.bf16 %v1727, %v1723
        %v1736 = vld [vmem:[#allocation8] sm:$0xf]
        %v1737 = vld [vmem:[#allocation8 + $0x4] sm:$0xf]
        %v1738 = vld [vmem:[#allocation8 + $0x8] sm:$0xf]
        %v1739 = vld [vmem:[#allocation8 + $0xc] sm:$0xf]
        %v1740 = vld [vmem:[#allocation8 + $0x10] sm:$0xf]
        %v1741 = vld [vmem:[#allocation8 + $0x14] sm:$0xf]
        %v1742 = vld [vmem:[#allocation8 + $0x18] sm:$0xf]
        %v1743 = vld [vmem:[#allocation8 + $0x1c] sm:$0xf]
        %v1744 = vld [vmem:[#allocation8 + $0x20] sm:$0xf]
        %v1745 = vld [vmem:[#allocation8 + $0x24] sm:$0xf]
        %v1746 = vld [vmem:[#allocation8 + $0x28] sm:$0xf]
        %v1747 = vld [vmem:[#allocation8 + $0x2c] sm:$0xf]
        %v1748 = vld [vmem:[#allocation8 + $0x30] sm:$0xf]
        %v1749 = vld [vmem:[#allocation8 + $0x34] sm:$0xf]
        %v1750 = vld [vmem:[#allocation8 + $0x38] sm:$0xf]
        %v1751 = vld [vmem:[#allocation8 + $0x3c] sm:$0xf]
        %v1752 = vld [vmem:[#allocation8 + $0x40] sm:$0xf]
        %v1753 = vld [vmem:[#allocation8 + $0x44] sm:$0xf]
        %v1754 = vld [vmem:[#allocation8 + $0x48] sm:$0xf]
        %v1755 = vld [vmem:[#allocation8 + $0x4c] sm:$0xf]
        %v1756 = vld [vmem:[#allocation8 + $0x50] sm:$0xf]
        %v1757 = vld [vmem:[#allocation8 + $0x54] sm:$0xf]
        %v1758 = vld [vmem:[#allocation8 + $0x58] sm:$0xf]
        %v1759 = vld [vmem:[#allocation8 + $0x5c] sm:$0xf]
        %v1760 = vld [vmem:[#allocation8 + $0x60] sm:$0xf]
        %v1761 = vld [vmem:[#allocation8 + $0x64] sm:$0xf]
        %v1762 = vld [vmem:[#allocation8 + $0x68] sm:$0xf]
        %v1763 = vld [vmem:[#allocation8 + $0x6c] sm:$0xf]
        %v1764 = vld [vmem:[#allocation8 + $0x70] sm:$0xf]
        %v1765 = vld [vmem:[#allocation8 + $0x74] sm:$0xf]
        %v1766 = vld [vmem:[#allocation8 + $0x78] sm:$0xf]
        %v1767 = vld [vmem:[#allocation8 + $0x7c] sm:$0xf]
        %v1768 = vld [vmem:[#allocation8 + $0x80] sm:$0xf]
        %v1769 = vld [vmem:[#allocation8 + $0x84] sm:$0xf]
        %v1770 = vld [vmem:[#allocation8 + $0x88] sm:$0xf]
        %v1771 = vld [vmem:[#allocation8 + $0x8c] sm:$0xf]
        %v1772 = vld [vmem:[#allocation8 + $0x90] sm:$0xf]
        %v1773 = vld [vmem:[#allocation8 + $0x94] sm:$0xf]
        %v1774 = vld [vmem:[#allocation8 + $0x98] sm:$0xf]
        %v1775 = vld [vmem:[#allocation8 + $0x9c] sm:$0xf]
        %v1776 = vld [vmem:[#allocation8 + $0xa0] sm:$0xf]
        %v1777 = vld [vmem:[#allocation8 + $0xa4] sm:$0xf]
        %v1778 = vld [vmem:[#allocation8 + $0xa8] sm:$0xf]
        %v1779 = vld [vmem:[#allocation8 + $0xac] sm:$0xf]
        %v1780 = vld [vmem:[#allocation8 + $0xb0] sm:$0xf]
        %v1781 = vld [vmem:[#allocation8 + $0xb4] sm:$0xf]
        %v1782 = vld [vmem:[#allocation8 + $0xb8] sm:$0xf]
        %v1783 = vld [vmem:[#allocation8 + $0xbc] sm:$0xf]
        %v1784 = vld [vmem:[#allocation8 + $0xc0] sm:$0xf]
        %v1785 = vld [vmem:[#allocation8 + $0xc4] sm:$0xf]
        %v1786 = vld [vmem:[#allocation8 + $0xc8] sm:$0xf]
        %v1787 = vld [vmem:[#allocation8 + $0xcc] sm:$0xf]
        %v1788 = vld [vmem:[#allocation8 + $0xd0] sm:$0xf]
        %v1789 = vld [vmem:[#allocation8 + $0xd4] sm:$0xf]
        %v1790 = vld [vmem:[#allocation8 + $0xd8] sm:$0xf]
        %v1791 = vld [vmem:[#allocation8 + $0xdc] sm:$0xf]
        %v1792 = vld [vmem:[#allocation8 + $0xe0] sm:$0xf]
        %v1793 = vld [vmem:[#allocation8 + $0xe4] sm:$0xf]
        %v1794 = vld [vmem:[#allocation8 + $0xe8] sm:$0xf]
        %v1795 = vld [vmem:[#allocation8 + $0xec] sm:$0xf]
        %v1796 = vld [vmem:[#allocation8 + $0xf0] sm:$0xf]
        %v1797 = vld [vmem:[#allocation8 + $0xf4] sm:$0xf]
        %v1798 = vld [vmem:[#allocation8 + $0xf8] sm:$0xf]
        %v1799 = vld [vmem:[#allocation8 + $0xfc] sm:$0xf]
        %v1864 = vunpack.c.l.b16 %v1736
        %v1865 = vunpack.c.l.b16 %v1737
        %v1866 = vunpack.c.l.b16 %v1738
        %v1867 = vunpack.c.l.b16 %v1739
        %v1868 = vunpack.c.l.b16 %v1740
        %v1869 = vunpack.c.l.b16 %v1741
        %v1870 = vunpack.c.l.b16 %v1742
        %v1871 = vunpack.c.l.b16 %v1743
        %v1872 = vunpack.c.l.b16 %v1744
        %v1873 = vunpack.c.l.b16 %v1745
        %v1874 = vunpack.c.l.b16 %v1746
        %v1875 = vunpack.c.l.b16 %v1747
        %v1876 = vunpack.c.l.b16 %v1748
        %v1877 = vunpack.c.l.b16 %v1749
        %v1878 = vunpack.c.l.b16 %v1750
        %v1879 = vunpack.c.l.b16 %v1751
        %v1880 = vunpack.c.l.b16 %v1752
        %v1881 = vunpack.c.l.b16 %v1753
        %v1882 = vunpack.c.l.b16 %v1754
        %v1883 = vunpack.c.l.b16 %v1755
        %v1884 = vunpack.c.l.b16 %v1756
        %v1885 = vunpack.c.l.b16 %v1757
        %v1886 = vunpack.c.l.b16 %v1758
        %v1887 = vunpack.c.l.b16 %v1759
        %v1888 = vunpack.c.l.b16 %v1760
        %v1889 = vunpack.c.l.b16 %v1761
        %v1890 = vunpack.c.l.b16 %v1762
        %v1891 = vunpack.c.l.b16 %v1763
        %v1892 = vunpack.c.l.b16 %v1764
        %v1893 = vunpack.c.l.b16 %v1765
        %v1894 = vunpack.c.l.b16 %v1766
        %v1895 = vunpack.c.l.b16 %v1767
        %v1896 = vunpack.c.l.b16 %v1768
        %v1897 = vunpack.c.l.b16 %v1769
        %v1898 = vunpack.c.l.b16 %v1770
        %v1899 = vunpack.c.l.b16 %v1771
        %v1900 = vunpack.c.l.b16 %v1772
        %v1901 = vunpack.c.l.b16 %v1773
        %v1902 = vunpack.c.l.b16 %v1774
        %v1903 = vunpack.c.l.b16 %v1775
        %v1904 = vunpack.c.l.b16 %v1776
        %v1905 = vunpack.c.l.b16 %v1777
        %v1906 = vunpack.c.l.b16 %v1778
        %v1907 = vunpack.c.l.b16 %v1779
        %v1908 = vunpack.c.l.b16 %v1780
        %v1909 = vunpack.c.l.b16 %v1781
        %v1910 = vunpack.c.l.b16 %v1782
        %v1911 = vunpack.c.l.b16 %v1783
        %v1912 = vunpack.c.l.b16 %v1784
        %v1913 = vunpack.c.l.b16 %v1785
        %v1914 = vunpack.c.l.b16 %v1786
        %v1915 = vunpack.c.l.b16 %v1787
        %v1916 = vunpack.c.l.b16 %v1788
        %v1917 = vunpack.c.l.b16 %v1789
        %v1918 = vunpack.c.l.b16 %v1790
        %v1919 = vunpack.c.l.b16 %v1791
        %v1920 = vunpack.c.l.b16 %v1792
        %v1921 = vunpack.c.l.b16 %v1793
        %v1922 = vunpack.c.l.b16 %v1794
        %v1923 = vunpack.c.l.b16 %v1795
        %v1924 = vunpack.c.l.b16 %v1796
        %v1925 = vunpack.c.l.b16 %v1797
        %v1926 = vunpack.c.l.b16 %v1798
        %v1927 = vunpack.c.l.b16 %v1799
        %v1928 = vpack.c.b16 %v1865, %v1864
        %v1929 = vpack.c.b16 %v1867, %v1866
        %v1930 = vpack.c.b16 %v1869, %v1868
        %v1931 = vpack.c.b16 %v1871, %v1870
        %v1932 = vpack.c.b16 %v1873, %v1872
        %v1933 = vpack.c.b16 %v1875, %v1874
        %v1934 = vpack.c.b16 %v1877, %v1876
        %v1935 = vpack.c.b16 %v1879, %v1878
        %v1936 = vpack.c.b16 %v1881, %v1880
        %v1937 = vpack.c.b16 %v1883, %v1882
        %v1938 = vpack.c.b16 %v1885, %v1884
        %v1939 = vpack.c.b16 %v1887, %v1886
        %v1940 = vpack.c.b16 %v1889, %v1888
        %v1941 = vpack.c.b16 %v1891, %v1890
        %v1942 = vpack.c.b16 %v1893, %v1892
        %v1943 = vpack.c.b16 %v1895, %v1894
        %v1944 = vpack.c.b16 %v1897, %v1896
        %v1945 = vpack.c.b16 %v1899, %v1898
        %v1946 = vpack.c.b16 %v1901, %v1900
        %v1947 = vpack.c.b16 %v1903, %v1902
        %v1948 = vpack.c.b16 %v1905, %v1904
        %v1949 = vpack.c.b16 %v1907, %v1906
        %v1950 = vpack.c.b16 %v1909, %v1908
        %v1951 = vpack.c.b16 %v1911, %v1910
        %v1952 = vpack.c.b16 %v1913, %v1912
        %v1953 = vpack.c.b16 %v1915, %v1914
        %v1954 = vpack.c.b16 %v1917, %v1916
        %v1955 = vpack.c.b16 %v1919, %v1918
        %v1956 = vpack.c.b16 %v1921, %v1920
        %v1957 = vpack.c.b16 %v1923, %v1922
        %v1958 = vpack.c.b16 %v1925, %v1924
        %v1959 = vpack.c.b16 %v1927, %v1926
        %1992 = vmatprep.subr.bf16.mxu0 0
        %1993 = vmatpush1.bf16.msra.mxu0 %v1928
        %1994 = vmatprep.subr.bf16.mxu0 0
        %1995 = vmatpush1.bf16.msra.mxu0 %v1929
        %1996 = vmatprep.subr.bf16.mxu0 0
        %1997 = vmatpush1.bf16.msra.mxu0 %v1930
        %1998 = vmatprep.subr.bf16.mxu0 0
        %1999 = vmatpush1.bf16.msra.mxu0 %v1931
        %2000 = vmatprep.subr.bf16.mxu0 0
        %2001 = vmatpush1.bf16.msra.mxu0 %v1932
        %2002 = vmatprep.subr.bf16.mxu0 0
        %2003 = vmatpush1.bf16.msra.mxu0 %v1933
        %2004 = vmatprep.subr.bf16.mxu0 0
        %2005 = vmatpush1.bf16.msra.mxu0 %v1934
        %2006 = vmatprep.subr.bf16.mxu0 0
        %2007 = vmatpush1.bf16.msra.mxu0 %v1935
        %2008 = vmatprep.subr.bf16.mxu0 0
        %2009 = vmatpush1.bf16.msra.mxu0 %v1936
        %2010 = vmatprep.subr.bf16.mxu0 0
        %2011 = vmatpush1.bf16.msra.mxu0 %v1937
        %2012 = vmatprep.subr.bf16.mxu0 0
        %2013 = vmatpush1.bf16.msra.mxu0 %v1938
        %2014 = vmatprep.subr.bf16.mxu0 0
        %2015 = vmatpush1.bf16.msra.mxu0 %v1939
        %2016 = vmatprep.subr.bf16.mxu0 0
        %2017 = vmatpush1.bf16.msra.mxu0 %v1940
        %2018 = vmatprep.subr.bf16.mxu0 0
        %2019 = vmatpush1.bf16.msra.mxu0 %v1941
        %2020 = vmatprep.subr.bf16.mxu0 0
        %2021 = vmatpush1.bf16.msra.mxu0 %v1942
        %2022 = vmatprep.subr.bf16.mxu0 0
        %2023 = vmatpush1.bf16.msra.mxu0 %v1943
        %2024 = vmatprep.mubr.bf16.mxu0 %v1729
        %2025 = vmatmul.mubr.bf16.gmra.mrb[0].mxu0 %v1728
        %v2026 = vpop.f32.mrb[0].mxu0
        %v2027 = vadd.f32 0.0, %v2026
        %v2028 = vpop.f32.mrb[0].mxu0
        %v2029 = vpop.f32.mrb[0].mxu0
        %v2030 = vadd.f32 0.0, %v2029
        %v2031 = vpop.f32.mrb[0].mxu0
        %2032 = vmatprep.mubr.bf16.mxu0 %v1733
        %2033 = vmatmul.mubr.bf16.gmra.mrb[0].mxu0 %v1732
        %v2034 = vpop.f32.mrb[0].mxu0
        %v2035 = vadd.f32 0.0, %v2034
        %v2036 = vpop.f32.mrb[0].mxu0
        %v2037 = vpop.f32.mrb[0].mxu0
        %v2038 = vadd.f32 0.0, %v2037
        %v2039 = vpop.f32.mrb[0].mxu0
        %2040 = vdwg.mxu0
        %2041 = vmatprep.subr.bf16.mxu0 0
        %2042 = vmatpush1.bf16.msra.mxu0 %v1944
        %2043 = vmatprep.subr.bf16.mxu0 0
        %2044 = vmatpush1.bf16.msra.mxu0 %v1945
        %2045 = vmatprep.subr.bf16.mxu0 0
        %2046 = vmatpush1.bf16.msra.mxu0 %v1946
        %2047 = vmatprep.subr.bf16.mxu0 0
        %2048 = vmatpush1.bf16.msra.mxu0 %v1947
        %2049 = vmatprep.subr.bf16.mxu0 0
        %2050 = vmatpush1.bf16.msra.mxu0 %v1948
        %2051 = vmatprep.subr.bf16.mxu0 0
        %2052 = vmatpush1.bf16.msra.mxu0 %v1949
        %2053 = vmatprep.subr.bf16.mxu0 0
        %2054 = vmatpush1.bf16.msra.mxu0 %v1950
        %2055 = vmatprep.subr.bf16.mxu0 0
        %2056 = vmatpush1.bf16.msra.mxu0 %v1951
        %2057 = vmatprep.subr.bf16.mxu0 0
        %2058 = vmatpush1.bf16.msra.mxu0 %v1952
        %2059 = vmatprep.subr.bf16.mxu0 0
        %2060 = vmatpush1.bf16.msra.mxu0 %v1953
        %2061 = vmatprep.subr.bf16.mxu0 0
        %2062 = vmatpush1.bf16.msra.mxu0 %v1954
        %2063 = vmatprep.subr.bf16.mxu0 0
        %2064 = vmatpush1.bf16.msra.mxu0 %v1955
        %2065 = vmatprep.subr.bf16.mxu0 0
        %2066 = vmatpush1.bf16.msra.mxu0 %v1956
        %2067 = vmatprep.subr.bf16.mxu0 0
        %2068 = vmatpush1.bf16.msra.mxu0 %v1957
        %2069 = vmatprep.subr.bf16.mxu0 0
        %2070 = vmatpush1.bf16.msra.mxu0 %v1958
        %2071 = vmatprep.subr.bf16.mxu0 0
        %2072 = vmatpush1.bf16.msra.mxu0 %v1959
        %2073 = vmatprep.mubr.bf16.mxu0 %v1731
        %2074 = vmatmul.mubr.bf16.gmra.mrb[0].mxu0 %v1730
        %v2075 = vpop.f32.mrb[0].mxu0
        %v2076 = vadd.f32 %v2027, %v2075
        %v2077 = vpop.f32.mrb[0].mxu0
        %v2078 = vpop.f32.mrb[0].mxu0
        %v2079 = vadd.f32 %v2030, %v2078
        %v2080 = vpop.f32.mrb[0].mxu0
        %2081 = vmatprep.mubr.bf16.mxu0 %v1735
        %2082 = vmatmul.mubr.bf16.gmra.mrb[0].mxu0 %v1734
        %v2083 = vpop.f32.mrb[0].mxu0
        %v2084 = vadd.f32 %v2035, %v2083
        %v2085 = vpop.f32.mrb[0].mxu0
        %v2086 = vpop.f32.mrb[0].mxu0
        %v2087 = vadd.f32 %v2038, %v2086
        %v2088 = vpop.f32.mrb[0].mxu0
        %2089 = vdwg.mxu0
        %v2090 = vpack.c.bf16 %v1381, %v1377
        %v2091 = vpack.c.bf16 %v1383, %v1379
        %v2092 = vpack.c.bf16 %v1701, %v1697
        %v2093 = vpack.c.bf16 %v1703, %v1699
        %v2094 = vpack.c.bf16 %v1389, %v1385
        %v2095 = vpack.c.bf16 %v1391, %v1387
        %v2096 = vpack.c.bf16 %v1709, %v1705
        %v2097 = vpack.c.bf16 %v1711, %v1707
        %2098 = vmatprep.subr.bf16.mxu0 0
        %2099 = vmatpush1.bf16.msra.mxu0 %v1928
        %2100 = vmatprep.subr.bf16.mxu0 0
        %2101 = vmatpush1.bf16.msra.mxu0 %v1929
        %2102 = vmatprep.subr.bf16.mxu0 0
        %2103 = vmatpush1.bf16.msra.mxu0 %v1930
        %2104 = vmatprep.subr.bf16.mxu0 0
        %2105 = vmatpush1.bf16.msra.mxu0 %v1931
        %2106 = vmatprep.subr.bf16.mxu0 0
        %2107 = vmatpush1.bf16.msra.mxu0 %v1932
        %2108 = vmatprep.subr.bf16.mxu0 0
        %2109 = vmatpush1.bf16.msra.mxu0 %v1933
        %2110 = vmatprep.subr.bf16.mxu0 0
        %2111 = vmatpush1.bf16.msra.mxu0 %v1934
        %2112 = vmatprep.subr.bf16.mxu0 0
        %2113 = vmatpush1.bf16.msra.mxu0 %v1935
        %2114 = vmatprep.subr.bf16.mxu0 0
        %2115 = vmatpush1.bf16.msra.mxu0 %v1936
        %2116 = vmatprep.subr.bf16.mxu0 0
        %2117 = vmatpush1.bf16.msra.mxu0 %v1937
        %2118 = vmatprep.subr.bf16.mxu0 0
        %2119 = vmatpush1.bf16.msra.mxu0 %v1938
        %2120 = vmatprep.subr.bf16.mxu0 0
        %2121 = vmatpush1.bf16.msra.mxu0 %v1939
        %2122 = vmatprep.subr.bf16.mxu0 0
        %2123 = vmatpush1.bf16.msra.mxu0 %v1940
        %2124 = vmatprep.subr.bf16.mxu0 0
        %2125 = vmatpush1.bf16.msra.mxu0 %v1941
        %2126 = vmatprep.subr.bf16.mxu0 0
        %2127 = vmatpush1.bf16.msra.mxu0 %v1942
        %2128 = vmatprep.subr.bf16.mxu0 0
        %2129 = vmatpush1.bf16.msra.mxu0 %v1943
        %2130 = vmatprep.mubr.bf16.mxu0 %v2091
        %2131 = vmatmul.mubr.bf16.gmra.mrb[0].mxu0 %v2090
        %v2132 = vpop.f32.mrb[0].mxu0
        %v2133 = vadd.f32 0.0, %v2132
        %v2134 = vpop.f32.mrb[0].mxu0
        %v2135 = vpop.f32.mrb[0].mxu0
        %v2136 = vadd.f32 0.0, %v2135
        %v2137 = vpop.f32.mrb[0].mxu0
        %2138 = vmatprep.mubr.bf16.mxu0 %v2095
        %2139 = vmatmul.mubr.bf16.gmra.mrb[0].mxu0 %v2094
        %v2140 = vpop.f32.mrb[0].mxu0
        %v2141 = vadd.f32 0.0, %v2140
        %v2142 = vpop.f32.mrb[0].mxu0
        %v2143 = vpop.f32.mrb[0].mxu0
        %v2144 = vadd.f32 0.0, %v2143
        %v2145 = vpop.f32.mrb[0].mxu0
        %2146 = vdwg.mxu0
        %2147 = vmatprep.subr.bf16.mxu0 0
        %2148 = vmatpush1.bf16.msra.mxu0 %v1944
        %2149 = vmatprep.subr.bf16.mxu0 0
        %2150 = vmatpush1.bf16.msra.mxu0 %v1945
        %2151 = vmatprep.subr.bf16.mxu0 0
        %2152 = vmatpush1.bf16.msra.mxu0 %v1946
        %2153 = vmatprep.subr.bf16.mxu0 0
        %2154 = vmatpush1.bf16.msra.mxu0 %v1947
        %2155 = vmatprep.subr.bf16.mxu0 0
        %2156 = vmatpush1.bf16.msra.mxu0 %v1948
        %2157 = vmatprep.subr.bf16.mxu0 0
        %2158 = vmatpush1.bf16.msra.mxu0 %v1949
        %2159 = vmatprep.subr.bf16.mxu0 0
        %2160 = vmatpush1.bf16.msra.mxu0 %v1950
        %2161 = vmatprep.subr.bf16.mxu0 0
        %2162 = vmatpush1.bf16.msra.mxu0 %v1951
        %2163 = vmatprep.subr.bf16.mxu0 0
        %2164 = vmatpush1.bf16.msra.mxu0 %v1952
        %2165 = vmatprep.subr.bf16.mxu0 0
        %2166 = vmatpush1.bf16.msra.mxu0 %v1953
        %2167 = vmatprep.subr.bf16.mxu0 0
        %2168 = vmatpush1.bf16.msra.mxu0 %v1954
        %2169 = vmatprep.subr.bf16.mxu0 0
        %2170 = vmatpush1.bf16.msra.mxu0 %v1955
        %2171 = vmatprep.subr.bf16.mxu0 0
        %2172 = vmatpush1.bf16.msra.mxu0 %v1956
        %2173 = vmatprep.subr.bf16.mxu0 0
        %2174 = vmatpush1.bf16.msra.mxu0 %v1957
        %2175 = vmatprep.subr.bf16.mxu0 0
        %2176 = vmatpush1.bf16.msra.mxu0 %v1958
        %2177 = vmatprep.subr.bf16.mxu0 0
        %2178 = vmatpush1.bf16.msra.mxu0 %v1959
        %2179 = vmatprep.mubr.bf16.mxu0 %v2093
        %2180 = vmatmul.mubr.bf16.gmra.mrb[0].mxu0 %v2092
        %v2181 = vpop.f32.mrb[0].mxu0
        %v2182 = vadd.f32 %v2133, %v2181
        %v2183 = vpop.f32.mrb[0].mxu0
        %v2184 = vpop.f32.mrb[0].mxu0
        %v2185 = vadd.f32 %v2136, %v2184
        %v2186 = vpop.f32.mrb[0].mxu0
        %2187 = vmatprep.mubr.bf16.mxu0 %v2097
        %2188 = vmatmul.mubr.bf16.gmra.mrb[0].mxu0 %v2096
        %v2189 = vpop.f32.mrb[0].mxu0
        %v2190 = vadd.f32 %v2141, %v2189
        %v2191 = vpop.f32.mrb[0].mxu0
        %v2192 = vpop.f32.mrb[0].mxu0
        %v2193 = vadd.f32 %v2144, %v2192
        %v2194 = vpop.f32.mrb[0].mxu0
        %2195 = vdwg.mxu0
        %v2196 = vrcp.pop %v2182
        %v2197 = vrcp.pop %v2185
        %v2198 = vrcp.pop %v2190
        %v2199 = vrcp.pop %v2193
        %v2200 = vmul.f32 %v2076, %v2196
        %v2201 = vmul.f32 %v2079, %v2197
        %v2202 = vmul.f32 %v2084, %v2198
        %v2203 = vmul.f32 %v2087, %v2199
        %2204 = vst [vmem:[%s267] sm:$0xff] %v2200
        %2205 = vst [vmem:[%s267 + $0x8] sm:$0xff] %v2201
        %2206 = vst [vmem:[%s267 + $0x10] sm:$0xff] %v2202
        %2207 = vst [vmem:[%s267 + $0x18] sm:$0xff] %v2203
        %s2208 = sand.u32 %s120, 1
        %s2209 = scalar_lea.sflag [#allocation4], %s2208
        %s2210 = sand.u32 %s120, 1
        %s2211 = smul.addr %s2210, 32
        %s2212 = scalar_lea.vmem [#allocation10], %s2211
        // Predicated region
        $region53: #{tpu_custom_call.1} parent=35 // pred_check
          %p2213 = pneg %p130
        $region54: #{tpu_custom_call.1} parent=35 // pred_check_branch
          %2215 = sbr.rel (%p2213) target = $region56
        $region55: #{tpu_custom_call.1} parent=35 // pred_region
          %s2216 = smul.u32 4, %s23
          %s2217 = ssub.s32 5, %s2216
          %p2218 = scmp.lt.s32.totalorder %s2217, 4
          %s2219 = scalar_select %p2218, %s2217, 4
          %s2220 = smul.u32 128, %s2219
          %s2222 = ssub.s32 512, %s2220
          %2223 = vsyncadd %s2209, %s2222
          %p2224 = scmp.ne.s32.totalorder 0, %s2220
          %s2225 = smul.addr %s2216, 128
          %s2226 = scalar_lea.hbm %s4, %s2225
          %s2227 = smul.u32 8, %s2219
          %s2228 = sshll.u32 %s2212, 4
          %s2229 = int_to_ptr.vmem [resolvable:$true] %s2228
          %s2230 = sshll.u32 %s2227, 4
          %2234 = dma.vmem_to_hbm [thread:$0]  (%p2224), %s2229, %s2230, %s2226, %s2209, 128, 128, 8
        $region56: #{tpu_custom_call.1} parent=35 // pred_fallthru
          _
      $region36: #{tpu_custom_call.1} parent=5 // pred_fallthru
        _
      %p2235 = scmp.le.s32.totalorder 2, %s18
      // Predicated region
      $region57: #{tpu_custom_call.1} parent=5 // pred_check
        %p2236 = pneg %p2235
      $region58: #{tpu_custom_call.1} parent=5 // pred_check_branch
        %2238 = sbr.rel (%p2236) target = $region60
      $region59: #{tpu_custom_call.1} parent=5 // pred_region
        %s2239 = ssub.s32 %s18, 2
        // Predicated region
        $region61: #{tpu_custom_call.1} parent=59 // pred_check
          %p2240 = pneg %p136
        $region62: #{tpu_custom_call.1} parent=59 // pred_check_branch
          %2242 = sbr.rel (%p2240) target = $region64
        $region63: #{tpu_custom_call.1} parent=59 // pred_region
          %s2243 = sand.u32 %s121, 1
          %s2244 = scalar_lea.sflag [#allocation4], %s2243
          %s2245 = sand.u32 %s121, 1
          %s2246 = smul.addr %s2245, 32
          %s2247 = scalar_lea.vmem [#allocation10], %s2246
          %2248 = dma.done %s2244, 512
        $region64: #{tpu_custom_call.1} parent=59 // pred_fallthru
          _
      $region60: #{tpu_custom_call.1} parent=5 // pred_fallthru
        _
    $region6: #{tpu_custom_call.1} parent=1 // loop_footer
      %s22 = sadd.s32 1, %s18
    $region7: #{tpu_custom_call.1} parent=1 // loop_footer_branch
      %17 = sbr.rel target = $region3
    $region8: #{tpu_custom_call.1} parent=1 // loop_exit
      _
    %2249 = vsyncpa [#allocation3], 1
    %s2250 = scalar_lea.sflag [#allocation3], 1
    %2251 = vsyncpa %s2250, 1
    %2252 = vsyncpa [#allocation6], 1
    %2253 = vsyncpa [#allocation9], 1
    %2254 = vsyncpa [#allocation4], 1
    %s2255 = scalar_lea.sflag [#allocation4], 1
    %2256 = vsyncpa %s2255, 1

</llo_original>
